<compile_context>
chip_gen: v7x
topology: tpu7x:2x2x1
jax: 0.10.0
libtpu: 0.0.40
codegen_flags: <defaults>
</compile_context>

<pallas_src>
import functools
from typing import NamedTuple

import numpy as np
import jax
import jax.numpy as jnp
from jax import lax
from jax.experimental import pallas as pl
from jax.experimental.pallas import tpu as pltpu


class PersistenceInformation(NamedTuple):
    pairing: np.ndarray
    diagram: np.ndarray
    dimension: int


def _round_up(v, m):
    return (v + m - 1) // m * m


def _num_tensorcores():
    # Multi-TensorCore parts: v4, v5p, v7x.  Single TC: v5e, v6e.
    try:
        kind = jax.devices()[0].device_kind.lower()
    except Exception:
        return 1
    return 2 if any(tag in kind for tag in ("v4", "v5p", "v7")) else 1


def _vmem_capacity_bytes():
    try:
        return int(pltpu.get_tpu_info().vmem_capacity_bytes)
    except Exception:
        return 64 << 20  # conservative (v7x per-TC physical VMEM)


def _pick_img_tile(num_images, per_image_bytes, vmem_budget, num_tc):
    """Largest images-per-step tile that fits the VMEM budget (double-buffered).

    Prefers multiples of 8 (full sublane occupancy).  Only on multi-TC parts do
    we insist on >= num_tc grid steps so every TensorCore gets work; on 1-TC
    chips (v5e/v6e) the largest tile wins even if it means a single grid step.
    """
    divisors = [t for t in range(1, num_images + 1) if num_images % t == 0]
    fits = [t for t in divisors if 2 * t * per_image_bytes <= vmem_budget] or [1]
    pref = [t for t in fits if t % 8 == 0] or fits
    if num_tc >= 2:
        multi_pref = [t for t in pref if num_images // t >= num_tc]
        if multi_pref:
            return max(multi_pref)
        multi_any = [t for t in fits if num_images // t >= num_tc]
        if multi_any:
            return max(multi_any)
    return max(pref)


def _pick_chunk(n):
    # Lane-chunk size for the one-hot gather; must divide N.
    if n <= 2048:
        return n
    for ch in (2048, 1024, 512, 256, 128):
        if n % ch == 0:
            return ch
    return n


def _cubical_kernel(x_ref, idx_ref, out_ref, *, superlevel, n, dp, p2, out_w, ch):
    # x_ref:   (1, T, N)      f32 filtration values, T images on sublanes
    # idx_ref: (1, T, P2)     i32 [creators(DP) | destroyers(DP)] per image (lanes)
    # out_ref: (1, T, OUT_W)  f32 packed [births | deaths | amax_bits | zeros]
    t = x_ref.shape[1]
    nc = n // ch

    idx_v = idx_ref[0]                                         # (T, P2) i32
    lane_p = lax.broadcasted_iota(jnp.int32, (1, p2), 1)       # hoisted pair-lane iota

    def chunk_body(c, carry):
        mx, amax, acc = carry
        off = c * ch
        if not isinstance(off, int):
            off = pl.multiple_of(off, ch)
        xc = x_ref[0, :, pl.ds(off, ch)]                       # (T, CH) f32
        if superlevel:                                         # `x = -x` from _forward
            xc = -xc
        iota_c = lax.broadcasted_iota(jnp.int32, (1, ch), 1) + off   # (1, CH)

        # running max / first-max-index (torch.argmax flat-index convention)
        c_mx = jnp.max(xc, axis=-1, keepdims=True)                            # (T, 1)
        c_am = jnp.min(jnp.where(xc == c_mx, iota_c, jnp.int32(n)),
                       axis=-1, keepdims=True)                                # (T, 1)
        amax = jnp.where(c_mx > mx, c_am, amax)
        mx = jnp.maximum(mx, c_mx)

        # chunked one-hot gather: per pair column, broadcast-compare + lane-reduce.
        # Live set per iteration is one (T, CH) select -> bounded vregs, VMEM
        # usage independent of N.
        for p in range(p2):                                    # static; P2 is small
            idx_p = idx_v[:, p:p + 1]                          # (T, 1)
            hit = iota_c == idx_p                              # (T, CH)
            contrib = jnp.sum(jnp.where(hit, xc, 0.0), axis=-1, keepdims=True)
            acc = acc + jnp.where(lane_p == p, contrib, 0.0)   # insert into column p
        return mx, amax, acc

    carry0 = (jnp.full((t, 1), -jnp.inf, jnp.float32),
              jnp.zeros((t, 1), jnp.int32),
              jnp.zeros((t, p2), jnp.float32))
    if nc == 1:
        mx, amax, acc = chunk_body(0, carry0)
    else:
        mx, amax, acc = lax.fori_loop(0, nc, chunk_body, carry0)

    # Infinite pairs: destroyer == -1 sentinel -> fake destroyer = argmax(x),
    # whose gathered value is exactly max(x) (= mx).  Only destroyer lanes are
    # eligible, so a negative creator index is never silently rewritten.
    # TODO(synk): NaN inputs make mx NaN and the argmax tie-break ill-defined
    # (matches neither torch nor gudhi cleanly); not handled.
    fake = (idx_v < 0) & (lane_p >= dp)
    vals = jnp.where(fake, mx, acc)                            # (T, P2)

    amax_bits = pltpu.bitcast(amax, jnp.float32)               # exact i32 round-trip
    pad = jnp.zeros((t, out_w - p2 - 1), jnp.float32)
    # single full-width, unmasked store of the packed output tile
    out_ref[0] = jnp.concatenate([vals, amax_bits, pad], axis=-1)


def cubical_diagrams_pallas(x, creators, destroyers, superlevel=False):
    """x: (B, C, H, W) f32; creators/destroyers: (B*C, DP) i32 flat indices.

    destroyer == -1 marks an infinite pair (fake destroyer = argmax(x)).
    Returns births (B*C, DP), deaths (B*C, DP), amax (B*C,) int32.
    """
    B, C, H, W = x.shape
    N = H * W
    num_images = B * C
    DP = creators.shape[-1]
    P2 = 2 * DP
    OUT_W = _round_up(P2 + 1, 128)         # lane-dense packed output width
    CH = _pick_chunk(N)

    # per-image VMEM footprint (lane-padded), double-buffered by the pipeline
    per_img = 4 * (_round_up(N, 128) + _round_up(P2, 128) + OUT_W)
    vmem_cap = min(_vmem_capacity_bytes(), 128 << 20)
    budget = max(vmem_cap // 2, 8 << 20)
    num_tc = _num_tensorcores()
    T = _pick_img_tile(num_images, per_img, budget, num_tc)
    nb = num_images // T
    needed = 2 * T * per_img + (1 << 20)
    vmem_limit = int(min(max(needed, 8 << 20), vmem_cap - (4 << 20)))

    xf = x.astype(jnp.float32).reshape(nb, T, N)
    idx = jnp.concatenate([creators.astype(jnp.int32),
                           destroyers.astype(jnp.int32)], axis=-1)
    idx = idx.reshape(nb, T, P2)

    kernel = functools.partial(_cubical_kernel, superlevel=superlevel,
                               n=N, dp=DP, p2=P2, out_w=OUT_W, ch=CH)
    out = pl.pallas_call(
        kernel,
        grid=(nb,),
        in_specs=[
            pl.BlockSpec((1, T, N), lambda i: (i, 0, 0)),
            pl.BlockSpec((1, T, P2), lambda i: (i, 0, 0)),
        ],
        out_specs=pl.BlockSpec((1, T, OUT_W), lambda i: (i, 0, 0)),
        out_shape=jax.ShapeDtypeStruct((nb, T, OUT_W), jnp.float32),
        compiler_params=pltpu.CompilerParams(
            dimension_semantics=("parallel",),
            vmem_limit_bytes=vmem_limit),
    )(xf, idx)

    out = out.reshape(num_images, OUT_W)
    births = out[:, :DP]
    deaths = out[:, DP:P2]
    amax = lax.bitcast_convert_type(out[:, P2], jnp.int32)
    return births, deaths, amax


def build_persistence_information(creators, destroyers, births, deaths, amax,
                                  B, C, D, P):
    """Host glue: reproduces the nested [B][C] -> per-dim PersistenceInformation
    structure of CubicalComplex.forward (dim=None, 4-D input => dims == 2).
    The nonzero()-based pairing mirrors the torch module's behaviour
    (data-dependent shapes -> host, not the hot path)."""
    births = np.asarray(births).reshape(B, C, D, P)
    deaths = np.asarray(deaths).reshape(B, C, D, P)
    amax = np.asarray(amax).reshape(B, C)
    cre_np = np.asarray(creators).reshape(B, C, D, P)
    des_np = np.asarray(destroyers).reshape(B, C, D, P)

    out = []
    for b in range(B):
        row = []
        for c in range(C):
            infos = []
            for d in range(D):
                cr = cre_np[b, c, d]
                de = des_np[b, c, d].copy()
                de[de < 0] = amax[b, c]
                gens = np.concatenate(
                    [np.nonzero(cr)[0][None, :], np.nonzero(de)[0][None, :]],
                    axis=1).astype(np.int64)
                diagram = np.stack([births[b, c, d], deaths[b, c, d]], axis=1)
                infos.append(PersistenceInformation(pairing=gens,
                                                    diagram=diagram,
                                                    dimension=d))
            row.append(infos)
        out.append(row)
    return out


if __name__ == "__main__":
    key = jax.random.PRNGKey(0)
    kx, kc, kd = jax.random.split(key, 3)

    B, C, H, W = 2, 4, 16, 16
    D, P = 2, 8                 # homology dims {0, 1} for 2-D images; P pairs/dim
    N = H * W
    num_images = B * C
    DP = D * P

    x = jax.random.normal(kx, (B, C, H, W), dtype=jnp.float32)

    # TODO(synk): gudhi.CubicalComplex.persistence()/cofaces_of_persistence_pairs()
    # (sequential boundary-matrix reduction) has no Pallas equivalent; synthetic
    # deterministic index pairs stand in for its output.
    creators = jax.random.randint(kc, (num_images, DP), 0, N, dtype=jnp.int32)
    destroyers = jax.random.randint(kd, (num_images, DP), 0, N, dtype=jnp.int32)
    # mark the last 2 pairs of each dim as "infinite" (destroyer = -1 sentinel)
    inf_mask = jnp.tile(jnp.arange(P) >= P - 2, (num_images, D))
    destroyers = jnp.where(inf_mask, -1, destroyers)

    births, deaths, amax = cubical_diagrams_pallas(x, creators, destroyers,
                                                   superlevel=False)
    jax.block_until_ready((births, deaths, amax))

    # pure-numpy reference check of the kernel hot path
    x_np = np.asarray(x).reshape(num_images, N)
    cre_np = np.asarray(creators)
    des_np = np.asarray(destroyers)
    b_np = np.asarray(births)
    d_np = np.asarray(deaths)
    a_np = np.asarray(amax)
    for i in range(num_images):
        am = int(np.argmax(x_np[i]))
        de = des_np[i].copy()
        de[de < 0] = am
        assert a_np[i] == am
        np.testing.assert_allclose(b_np[i], x_np[i][cre_np[i]], rtol=1e-6)
        np.testing.assert_allclose(d_np[i], x_np[i][de], rtol=1e-6)

    # superlevel branch (x -> -x) check
    b2, d2, a2 = cubical_diagrams_pallas(x, creators, destroyers, superlevel=True)
    jax.block_until_ready((b2, d2, a2))
    b2_np, d2_np, a2_np = np.asarray(b2), np.asarray(d2), np.asarray(a2)
    for i in range(num_images):
        xn = -x_np[i]
        am = int(np.argmax(xn))
        de = des_np[i].copy()
        de[de < 0] = am
        assert a2_np[i] == am
        np.testing.assert_allclose(b2_np[i], xn[cre_np[i]], rtol=1e-6)
        np.testing.assert_allclose(d2_np[i], xn[de], rtol=1e-6)

    result = build_persistence_information(creators, destroyers,
                                           births, deaths, amax, B, C, D, P)
    assert len(result) == B and len(result[0]) == C
    assert result[0][0][0].diagram.shape == (P, 2)

    print("KERNEL_OK")
</pallas_src>

<mosaic_0001>
module attributes {stable_mosaic.version = 11 : i64} {
  func.func @_cubical_kernel(%arg0: i32, %arg1: memref<1x8x256xf32, #tpu.memory_space<vmem>>, %arg2: memref<1x8x32xi32, #tpu.memory_space<vmem>>, %arg3: memref<1x8x128xf32, #tpu.memory_space<vmem>>) attributes {dimension_semantics = [#tpu.dimension_semantics<parallel>], iteration_bounds = array<i64: 1>, scalar_prefetch = 0 : i64, scratch_operands = 0 : i64, tpu.core_type = #tpu.core_type<tc>, window_params = [{transform_indices = @transform_0, window_bounds = array<i64: 1, 8, 256>}, {transform_indices = @transform_1, window_bounds = array<i64: 1, 8, 32>}, {transform_indices = @transform_2, window_bounds = array<i64: 1, 8, 128>}]} {
    %c0 = arith.constant 0 : index
    %c0_0 = arith.constant 0 : index
    %c0_1 = arith.constant 0 : index
    %0 = vector.load %arg2[%c0, %c0_0, %c0_1] : memref<1x8x32xi32, #tpu.memory_space<vmem>>, vector<1x8x32xi32>
    %1 = vector.shape_cast %0 : vector<1x8x32xi32> to vector<8x32xi32>
    %2 = tpu.iota {dimensions = array<i32: 1>} : vector<1x32xi32>
    %cst = arith.constant 0xFF800000 : f32
    %3 = vector.broadcast %cst : f32 to vector<8x1xf32>
    %c0_i32 = arith.constant 0 : i32
    %4 = vector.broadcast %c0_i32 : i32 to vector<8x1xi32>
    %cst_2 = arith.constant 0.000000e+00 : f32
    %5 = vector.broadcast %cst_2 : f32 to vector<8x32xf32>
    %c0_3 = arith.constant 0 : index
    %c0_4 = arith.constant 0 : index
    %c0_5 = arith.constant 0 : index
    %6 = vector.load %arg1[%c0_3, %c0_4, %c0_5] : memref<1x8x256xf32, #tpu.memory_space<vmem>>, vector<1x8x256xf32>
    %7 = vector.shape_cast %6 : vector<1x8x256xf32> to vector<8x256xf32>
    %8 = tpu.iota {dimensions = array<i32: 1>} : vector<1x256xi32>
    %c0_i32_6 = arith.constant 0 : i32
    %9 = vector.broadcast %c0_i32_6 : i32 to vector<1x256xi32>
    %10 = arith.addi %8, %9 : vector<1x256xi32>
    %cst_7 = arith.constant dense<0xFF800000> : vector<8xf32>
    %11 = vector.multi_reduction <maximumf>, %7, %cst_7 [1] : vector<8x256xf32> to vector<8xf32>
    %12 = vector.shape_cast %11 : vector<8xf32> to vector<8x1xf32>
    %13 = vector.broadcast %12 : vector<8x1xf32> to vector<8x256xf32>
    %14 = arith.cmpf oeq, %7, %13 : vector<8x256xf32>
    %c256_i32 = arith.constant 256 : i32
    %15 = vector.shape_cast %10 : vector<1x256xi32> to vector<1x256xi32>
    %16 = vector.broadcast %15 : vector<1x256xi32> to vector<8x256xi32>
    %17 = vector.broadcast %c256_i32 : i32 to vector<8x256xi32>
    %18 = arith.select %14, %16, %17 : vector<8x256xi1>, vector<8x256xi32>
    %cst_8 = arith.constant dense<2147483647> : vector<8xi32>
    %19 = vector.multi_reduction <minsi>, %18, %cst_8 [1] : vector<8x256xi32> to vector<8xi32>
    %20 = vector.shape_cast %19 : vector<8xi32> to vector<8x1xi32>
    %21 = arith.cmpf ogt, %12, %3 : vector<8x1xf32>
    %22 = arith.select %21, %20, %4 : vector<8x1xi1>, vector<8x1xi32>
    %23 = arith.maximumf %3, %12 : vector<8x1xf32>
    %24 = vector.extract_strided_slice %1 {offsets = [0, 0], sizes = [8, 1], strides = [1, 1]} : vector<8x32xi32> to vector<8x1xi32>
    %25 = vector.broadcast %10 : vector<1x256xi32> to vector<8x256xi32>
    %26 = vector.broadcast %24 : vector<8x1xi32> to vector<8x256xi32>
    %27 = arith.cmpi eq, %25, %26 : vector<8x256xi32>
    %cst_9 = arith.constant 0.000000e+00 : f32
    %28 = vector.broadcast %cst_9 : f32 to vector<8x256xf32>
    %29 = arith.select %27, %7, %28 : vector<8x256xi1>, vector<8x256xf32>
    %cst_10 = arith.constant dense<0.000000e+00> : vector<8xf32>
    %30 = vector.multi_reduction <add>, %29, %cst_10 [1] : vector<8x256xf32> to vector<8xf32>
    %31 = vector.shape_cast %30 : vector<8xf32> to vector<8x1xf32>
    %c0_i32_11 = arith.constant 0 : i32
    %32 = vector.broadcast %c0_i32_11 : i32 to vector<1x32xi32>
    %33 = arith.cmpi eq, %2, %32 : vector<1x32xi32>
    %cst_12 = arith.constant 0.000000e+00 : f32
    %34 = vector.shape_cast %33 : vector<1x32xi1> to vector<1x32xi1>
    %35 = vector.broadcast %34 : vector<1x32xi1> to vector<8x32xi1>
    %36 = vector.shape_cast %31 : vector<8x1xf32> to vector<8x1xf32>
    %37 = vector.broadcast %36 : vector<8x1xf32> to vector<8x32xf32>
    %38 = vector.broadcast %cst_12 : f32 to vector<8x32xf32>
    %39 = arith.select %35, %37, %38 : vector<8x32xi1>, vector<8x32xf32>
    %40 = arith.addf %5, %39 : vector<8x32xf32>
    %41 = vector.extract_strided_slice %1 {offsets = [0, 1], sizes = [8, 1], strides = [1, 1]} : vector<8x32xi32> to vector<8x1xi32>
    %42 = vector.broadcast %10 : vector<1x256xi32> to vector<8x256xi32>
    %43 = vector.broadcast %41 : vector<8x1xi32> to vector<8x256xi32>
    %44 = arith.cmpi eq, %42, %43 : vector<8x256xi32>
    %cst_13 = arith.constant 0.000000e+00 : f32
    %45 = vector.broadcast %cst_13 : f32 to vector<8x256xf32>
    %46 = arith.select %44, %7, %45 : vector<8x256xi1>, vector<8x256xf32>
    %cst_14 = arith.constant dense<0.000000e+00> : vector<8xf32>
    %47 = vector.multi_reduction <add>, %46, %cst_14 [1] : vector<8x256xf32> to vector<8xf32>
    %48 = vector.shape_cast %47 : vector<8xf32> to vector<8x1xf32>
    %c1_i32 = arith.constant 1 : i32
    %49 = vector.broadcast %c1_i32 : i32 to vector<1x32xi32>
    %50 = arith.cmpi eq, %2, %49 : vector<1x32xi32>
    %cst_15 = arith.constant 0.000000e+00 : f32
    %51 = vector.shape_cast %50 : vector<1x32xi1> to vector<1x32xi1>
    %52 = vector.broadcast %51 : vector<1x32xi1> to vector<8x32xi1>
    %53 = vector.shape_cast %48 : vector<8x1xf32> to vector<8x1xf32>
    %54 = vector.broadcast %53 : vector<8x1xf32> to vector<8x32xf32>
    %55 = vector.broadcast %cst_15 : f32 to vector<8x32xf32>
    %56 = arith.select %52, %54, %55 : vector<8x32xi1>, vector<8x32xf32>
    %57 = arith.addf %40, %56 : vector<8x32xf32>
    %58 = vector.extract_strided_slice %1 {offsets = [0, 2], sizes = [8, 1], strides = [1, 1]} : vector<8x32xi32> to vector<8x1xi32>
    %59 = vector.broadcast %10 : vector<1x256xi32> to vector<8x256xi32>
    %60 = vector.broadcast %58 : vector<8x1xi32> to vector<8x256xi32>
    %61 = arith.cmpi eq, %59, %60 : vector<8x256xi32>
    %cst_16 = arith.constant 0.000000e+00 : f32
    %62 = vector.broadcast %cst_16 : f32 to vector<8x256xf32>
    %63 = arith.select %61, %7, %62 : vector<8x256xi1>, vector<8x256xf32>
    %cst_17 = arith.constant dense<0.000000e+00> : vector<8xf32>
    %64 = vector.multi_reduction <add>, %63, %cst_17 [1] : vector<8x256xf32> to vector<8xf32>
    %65 = vector.shape_cast %64 : vector<8xf32> to vector<8x1xf32>
    %c2_i32 = arith.constant 2 : i32
    %66 = vector.broadcast %c2_i32 : i32 to vector<1x32xi32>
    %67 = arith.cmpi eq, %2, %66 : vector<1x32xi32>
    %cst_18 = arith.constant 0.000000e+00 : f32
    %68 = vector.shape_cast %67 : vector<1x32xi1> to vector<1x32xi1>
    %69 = vector.broadcast %68 : vector<1x32xi1> to vector<8x32xi1>
    %70 = vector.shape_cast %65 : vector<8x1xf32> to vector<8x1xf32>
    %71 = vector.broadcast %70 : vector<8x1xf32> to vector<8x32xf32>
    %72 = vector.broadcast %cst_18 : f32 to vector<8x32xf32>
    %73 = arith.select %69, %71, %72 : vector<8x32xi1>, vector<8x32xf32>
    %74 = arith.addf %57, %73 : vector<8x32xf32>
    %75 = vector.extract_strided_slice %1 {offsets = [0, 3], sizes = [8, 1], strides = [1, 1]} : vector<8x32xi32> to vector<8x1xi32>
    %76 = vector.broadcast %10 : vector<1x256xi32> to vector<8x256xi32>
    %77 = vector.broadcast %75 : vector<8x1xi32> to vector<8x256xi32>
    %78 = arith.cmpi eq, %76, %77 : vector<8x256xi32>
    %cst_19 = arith.constant 0.000000e+00 : f32
    %79 = vector.broadcast %cst_19 : f32 to vector<8x256xf32>
    %80 = arith.select %78, %7, %79 : vector<8x256xi1>, vector<8x256xf32>
    %cst_20 = arith.constant dense<0.000000e+00> : vector<8xf32>
    %81 = vector.multi_reduction <add>, %80, %cst_20 [1] : vector<8x256xf32> to vector<8xf32>
    %82 = vector.shape_cast %81 : vector<8xf32> to vector<8x1xf32>
    %c3_i32 = arith.constant 3 : i32
    %83 = vector.broadcast %c3_i32 : i32 to vector<1x32xi32>
    %84 = arith.cmpi eq, %2, %83 : vector<1x32xi32>
    %cst_21 = arith.constant 0.000000e+00 : f32
    %85 = vector.shape_cast %84 : vector<1x32xi1> to vector<1x32xi1>
    %86 = vector.broadcast %85 : vector<1x32xi1> to vector<8x32xi1>
    %87 = vector.shape_cast %82 : vector<8x1xf32> to vector<8x1xf32>
    %88 = vector.broadcast %87 : vector<8x1xf32> to vector<8x32xf32>
    %89 = vector.broadcast %cst_21 : f32 to vector<8x32xf32>
    %90 = arith.select %86, %88, %89 : vector<8x32xi1>, vector<8x32xf32>
    %91 = arith.addf %74, %90 : vector<8x32xf32>
    %92 = vector.extract_strided_slice %1 {offsets = [0, 4], sizes = [8, 1], strides = [1, 1]} : vector<8x32xi32> to vector<8x1xi32>
    %93 = vector.broadcast %10 : vector<1x256xi32> to vector<8x256xi32>
    %94 = vector.broadcast %92 : vector<8x1xi32> to vector<8x256xi32>
    %95 = arith.cmpi eq, %93, %94 : vector<8x256xi32>
    %cst_22 = arith.constant 0.000000e+00 : f32
    %96 = vector.broadcast %cst_22 : f32 to vector<8x256xf32>
    %97 = arith.select %95, %7, %96 : vector<8x256xi1>, vector<8x256xf32>
    %cst_23 = arith.constant dense<0.000000e+00> : vector<8xf32>
    %98 = vector.multi_reduction <add>, %97, %cst_23 [1] : vector<8x256xf32> to vector<8xf32>
    %99 = vector.shape_cast %98 : vector<8xf32> to vector<8x1xf32>
    %c4_i32 = arith.constant 4 : i32
    %100 = vector.broadcast %c4_i32 : i32 to vector<1x32xi32>
    %101 = arith.cmpi eq, %2, %100 : vector<1x32xi32>
    %cst_24 = arith.constant 0.000000e+00 : f32
    %102 = vector.shape_cast %101 : vector<1x32xi1> to vector<1x32xi1>
    %103 = vector.broadcast %102 : vector<1x32xi1> to vector<8x32xi1>
    %104 = vector.shape_cast %99 : vector<8x1xf32> to vector<8x1xf32>
    %105 = vector.broadcast %104 : vector<8x1xf32> to vector<8x32xf32>
    %106 = vector.broadcast %cst_24 : f32 to vector<8x32xf32>
    %107 = arith.select %103, %105, %106 : vector<8x32xi1>, vector<8x32xf32>
    %108 = arith.addf %91, %107 : vector<8x32xf32>
    %109 = vector.extract_strided_slice %1 {offsets = [0, 5], sizes = [8, 1], strides = [1, 1]} : vector<8x32xi32> to vector<8x1xi32>
    %110 = vector.broadcast %10 : vector<1x256xi32> to vector<8x256xi32>
    %111 = vector.broadcast %109 : vector<8x1xi32> to vector<8x256xi32>
    %112 = arith.cmpi eq, %110, %111 : vector<8x256xi32>
    %cst_25 = arith.constant 0.000000e+00 : f32
    %113 = vector.broadcast %cst_25 : f32 to vector<8x256xf32>
    %114 = arith.select %112, %7, %113 : vector<8x256xi1>, vector<8x256xf32>
    %cst_26 = arith.constant dense<0.000000e+00> : vector<8xf32>
    %115 = vector.multi_reduction <add>, %114, %cst_26 [1] : vector<8x256xf32> to vector<8xf32>
    %116 = vector.shape_cast %115 : vector<8xf32> to vector<8x1xf32>
    %c5_i32 = arith.constant 5 : i32
    %117 = vector.broadcast %c5_i32 : i32 to vector<1x32xi32>
    %118 = arith.cmpi eq, %2, %117 : vector<1x32xi32>
    %cst_27 = arith.constant 0.000000e+00 : f32
    %119 = vector.shape_cast %118 : vector<1x32xi1> to vector<1x32xi1>
    %120 = vector.broadcast %119 : vector<1x32xi1> to vector<8x32xi1>
    %121 = vector.shape_cast %116 : vector<8x1xf32> to vector<8x1xf32>
    %122 = vector.broadcast %121 : vector<8x1xf32> to vector<8x32xf32>
    %123 = vector.broadcast %cst_27 : f32 to vector<8x32xf32>
    %124 = arith.select %120, %122, %123 : vector<8x32xi1>, vector<8x32xf32>
    %125 = arith.addf %108, %124 : vector<8x32xf32>
    %126 = vector.extract_strided_slice %1 {offsets = [0, 6], sizes = [8, 1], strides = [1, 1]} : vector<8x32xi32> to vector<8x1xi32>
    %127 = vector.broadcast %10 : vector<1x256xi32> to vector<8x256xi32>
    %128 = vector.broadcast %126 : vector<8x1xi32> to vector<8x256xi32>
    %129 = arith.cmpi eq, %127, %128 : vector<8x256xi32>
    %cst_28 = arith.constant 0.000000e+00 : f32
    %130 = vector.broadcast %cst_28 : f32 to vector<8x256xf32>
    %131 = arith.select %129, %7, %130 : vector<8x256xi1>, vector<8x256xf32>
    %cst_29 = arith.constant dense<0.000000e+00> : vector<8xf32>
    %132 = vector.multi_reduction <add>, %131, %cst_29 [1] : vector<8x256xf32> to vector<8xf32>
    %133 = vector.shape_cast %132 : vector<8xf32> to vector<8x1xf32>
    %c6_i32 = arith.constant 6 : i32
    %134 = vector.broadcast %c6_i32 : i32 to vector<1x32xi32>
    %135 = arith.cmpi eq, %2, %134 : vector<1x32xi32>
    %cst_30 = arith.constant 0.000000e+00 : f32
    %136 = vector.shape_cast %135 : vector<1x32xi1> to vector<1x32xi1>
    %137 = vector.broadcast %136 : vector<1x32xi1> to vector<8x32xi1>
    %138 = vector.shape_cast %133 : vector<8x1xf32> to vector<8x1xf32>
    %139 = vector.broadcast %138 : vector<8x1xf32> to vector<8x32xf32>
    %140 = vector.broadcast %cst_30 : f32 to vector<8x32xf32>
    %141 = arith.select %137, %139, %140 : vector<8x32xi1>, vector<8x32xf32>
    %142 = arith.addf %125, %141 : vector<8x32xf32>
    %143 = vector.extract_strided_slice %1 {offsets = [0, 7], sizes = [8, 1], strides = [1, 1]} : vector<8x32xi32> to vector<8x1xi32>
    %144 = vector.broadcast %10 : vector<1x256xi32> to vector<8x256xi32>
    %145 = vector.broadcast %143 : vector<8x1xi32> to vector<8x256xi32>
    %146 = arith.cmpi eq, %144, %145 : vector<8x256xi32>
    %cst_31 = arith.constant 0.000000e+00 : f32
    %147 = vector.broadcast %cst_31 : f32 to vector<8x256xf32>
    %148 = arith.select %146, %7, %147 : vector<8x256xi1>, vector<8x256xf32>
    %cst_32 = arith.constant dense<0.000000e+00> : vector<8xf32>
    %149 = vector.multi_reduction <add>, %148, %cst_32 [1] : vector<8x256xf32> to vector<8xf32>
    %150 = vector.shape_cast %149 : vector<8xf32> to vector<8x1xf32>
    %c7_i32 = arith.constant 7 : i32
    %151 = vector.broadcast %c7_i32 : i32 to vector<1x32xi32>
    %152 = arith.cmpi eq, %2, %151 : vector<1x32xi32>
    %cst_33 = arith.constant 0.000000e+00 : f32
    %153 = vector.shape_cast %152 : vector<1x32xi1> to vector<1x32xi1>
    %154 = vector.broadcast %153 : vector<1x32xi1> to vector<8x32xi1>
    %155 = vector.shape_cast %150 : vector<8x1xf32> to vector<8x1xf32>
    %156 = vector.broadcast %155 : vector<8x1xf32> to vector<8x32xf32>
    %157 = vector.broadcast %cst_33 : f32 to vector<8x32xf32>
    %158 = arith.select %154, %156, %157 : vector<8x32xi1>, vector<8x32xf32>
    %159 = arith.addf %142, %158 : vector<8x32xf32>
    %160 = vector.extract_strided_slice %1 {offsets = [0, 8], sizes = [8, 1], strides = [1, 1]} : vector<8x32xi32> to vector<8x1xi32>
    %161 = vector.broadcast %10 : vector<1x256xi32> to vector<8x256xi32>
    %162 = vector.broadcast %160 : vector<8x1xi32> to vector<8x256xi32>
    %163 = arith.cmpi eq, %161, %162 : vector<8x256xi32>
    %cst_34 = arith.constant 0.000000e+00 : f32
    %164 = vector.broadcast %cst_34 : f32 to vector<8x256xf32>
    %165 = arith.select %163, %7, %164 : vector<8x256xi1>, vector<8x256xf32>
    %cst_35 = arith.constant dense<0.000000e+00> : vector<8xf32>
    %166 = vector.multi_reduction <add>, %165, %cst_35 [1] : vector<8x256xf32> to vector<8xf32>
    %167 = vector.shape_cast %166 : vector<8xf32> to vector<8x1xf32>
    %c8_i32 = arith.constant 8 : i32
    %168 = vector.broadcast %c8_i32 : i32 to vector<1x32xi32>
    %169 = arith.cmpi eq, %2, %168 : vector<1x32xi32>
    %cst_36 = arith.constant 0.000000e+00 : f32
    %170 = vector.shape_cast %169 : vector<1x32xi1> to vector<1x32xi1>
    %171 = vector.broadcast %170 : vector<1x32xi1> to vector<8x32xi1>
    %172 = vector.shape_cast %167 : vector<8x1xf32> to vector<8x1xf32>
    %173 = vector.broadcast %172 : vector<8x1xf32> to vector<8x32xf32>
    %174 = vector.broadcast %cst_36 : f32 to vector<8x32xf32>
    %175 = arith.select %171, %173, %174 : vector<8x32xi1>, vector<8x32xf32>
    %176 = arith.addf %159, %175 : vector<8x32xf32>
    %177 = vector.extract_strided_slice %1 {offsets = [0, 9], sizes = [8, 1], strides = [1, 1]} : vector<8x32xi32> to vector<8x1xi32>
    %178 = vector.broadcast %10 : vector<1x256xi32> to vector<8x256xi32>
    %179 = vector.broadcast %177 : vector<8x1xi32> to vector<8x256xi32>
    %180 = arith.cmpi eq, %178, %179 : vector<8x256xi32>
    %cst_37 = arith.constant 0.000000e+00 : f32
    %181 = vector.broadcast %cst_37 : f32 to vector<8x256xf32>
    %182 = arith.select %180, %7, %181 : vector<8x256xi1>, vector<8x256xf32>
    %cst_38 = arith.constant dense<0.000000e+00> : vector<8xf32>
    %183 = vector.multi_reduction <add>, %182, %cst_38 [1] : vector<8x256xf32> to vector<8xf32>
    %184 = vector.shape_cast %183 : vector<8xf32> to vector<8x1xf32>
    %c9_i32 = arith.constant 9 : i32
    %185 = vector.broadcast %c9_i32 : i32 to vector<1x32xi32>
    %186 = arith.cmpi eq, %2, %185 : vector<1x32xi32>
    %cst_39 = arith.constant 0.000000e+00 : f32
    %187 = vector.shape_cast %186 : vector<1x32xi1> to vector<1x32xi1>
    %188 = vector.broadcast %187 : vector<1x32xi1> to vector<8x32xi1>
    %189 = vector.shape_cast %184 : vector<8x1xf32> to vector<8x1xf32>
    %190 = vector.broadcast %189 : vector<8x1xf32> to vector<8x32xf32>
    %191 = vector.broadcast %cst_39 : f32 to vector<8x32xf32>
    %192 = arith.select %188, %190, %191 : vector<8x32xi1>, vector<8x32xf32>
    %193 = arith.addf %176, %192 : vector<8x32xf32>
    %194 = vector.extract_strided_slice %1 {offsets = [0, 10], sizes = [8, 1], strides = [1, 1]} : vector<8x32xi32> to vector<8x1xi32>
    %195 = vector.broadcast %10 : vector<1x256xi32> to vector<8x256xi32>
    %196 = vector.broadcast %194 : vector<8x1xi32> to vector<8x256xi32>
    %197 = arith.cmpi eq, %195, %196 : vector<8x256xi32>
    %cst_40 = arith.constant 0.000000e+00 : f32
    %198 = vector.broadcast %cst_40 : f32 to vector<8x256xf32>
    %199 = arith.select %197, %7, %198 : vector<8x256xi1>, vector<8x256xf32>
    %cst_41 = arith.constant dense<0.000000e+00> : vector<8xf32>
    %200 = vector.multi_reduction <add>, %199, %cst_41 [1] : vector<8x256xf32> to vector<8xf32>
    %201 = vector.shape_cast %200 : vector<8xf32> to vector<8x1xf32>
    %c10_i32 = arith.constant 10 : i32
    %202 = vector.broadcast %c10_i32 : i32 to vector<1x32xi32>
    %203 = arith.cmpi eq, %2, %202 : vector<1x32xi32>
    %cst_42 = arith.constant 0.000000e+00 : f32
    %204 = vector.shape_cast %203 : vector<1x32xi1> to vector<1x32xi1>
    %205 = vector.broadcast %204 : vector<1x32xi1> to vector<8x32xi1>
    %206 = vector.shape_cast %201 : vector<8x1xf32> to vector<8x1xf32>
    %207 = vector.broadcast %206 : vector<8x1xf32> to vector<8x32xf32>
    %208 = vector.broadcast %cst_42 : f32 to vector<8x32xf32>
    %209 = arith.select %205, %207, %208 : vector<8x32xi1>, vector<8x32xf32>
    %210 = arith.addf %193, %209 : vector<8x32xf32>
    %211 = vector.extract_strided_slice %1 {offsets = [0, 11], sizes = [8, 1], strides = [1, 1]} : vector<8x32xi32> to vector<8x1xi32>
    %212 = vector.broadcast %10 : vector<1x256xi32> to vector<8x256xi32>
    %213 = vector.broadcast %211 : vector<8x1xi32> to vector<8x256xi32>
    %214 = arith.cmpi eq, %212, %213 : vector<8x256xi32>
    %cst_43 = arith.constant 0.000000e+00 : f32
    %215 = vector.broadcast %cst_43 : f32 to vector<8x256xf32>
    %216 = arith.select %214, %7, %215 : vector<8x256xi1>, vector<8x256xf32>
    %cst_44 = arith.constant dense<0.000000e+00> : vector<8xf32>
    %217 = vector.multi_reduction <add>, %216, %cst_44 [1] : vector<8x256xf32> to vector<8xf32>
    %218 = vector.shape_cast %217 : vector<8xf32> to vector<8x1xf32>
    %c11_i32 = arith.constant 11 : i32
    %219 = vector.broadcast %c11_i32 : i32 to vector<1x32xi32>
    %220 = arith.cmpi eq, %2, %219 : vector<1x32xi32>
    %cst_45 = arith.constant 0.000000e+00 : f32
    %221 = vector.shape_cast %220 : vector<1x32xi1> to vector<1x32xi1>
    %222 = vector.broadcast %221 : vector<1x32xi1> to vector<8x32xi1>
    %223 = vector.shape_cast %218 : vector<8x1xf32> to vector<8x1xf32>
    %224 = vector.broadcast %223 : vector<8x1xf32> to vector<8x32xf32>
    %225 = vector.broadcast %cst_45 : f32 to vector<8x32xf32>
    %226 = arith.select %222, %224, %225 : vector<8x32xi1>, vector<8x32xf32>
    %227 = arith.addf %210, %226 : vector<8x32xf32>
    %228 = vector.extract_strided_slice %1 {offsets = [0, 12], sizes = [8, 1], strides = [1, 1]} : vector<8x32xi32> to vector<8x1xi32>
    %229 = vector.broadcast %10 : vector<1x256xi32> to vector<8x256xi32>
    %230 = vector.broadcast %228 : vector<8x1xi32> to vector<8x256xi32>
    %231 = arith.cmpi eq, %229, %230 : vector<8x256xi32>
    %cst_46 = arith.constant 0.000000e+00 : f32
    %232 = vector.broadcast %cst_46 : f32 to vector<8x256xf32>
    %233 = arith.select %231, %7, %232 : vector<8x256xi1>, vector<8x256xf32>
    %cst_47 = arith.constant dense<0.000000e+00> : vector<8xf32>
    %234 = vector.multi_reduction <add>, %233, %cst_47 [1] : vector<8x256xf32> to vector<8xf32>
    %235 = vector.shape_cast %234 : vector<8xf32> to vector<8x1xf32>
    %c12_i32 = arith.constant 12 : i32
    %236 = vector.broadcast %c12_i32 : i32 to vector<1x32xi32>
    %237 = arith.cmpi eq, %2, %236 : vector<1x32xi32>
    %cst_48 = arith.constant 0.000000e+00 : f32
    %238 = vector.shape_cast %237 : vector<1x32xi1> to vector<1x32xi1>
    %239 = vector.broadcast %238 : vector<1x32xi1> to vector<8x32xi1>
    %240 = vector.shape_cast %235 : vector<8x1xf32> to vector<8x1xf32>
    %241 = vector.broadcast %240 : vector<8x1xf32> to vector<8x32xf32>
    %242 = vector.broadcast %cst_48 : f32 to vector<8x32xf32>
    %243 = arith.select %239, %241, %242 : vector<8x32xi1>, vector<8x32xf32>
    %244 = arith.addf %227, %243 : vector<8x32xf32>
    %245 = vector.extract_strided_slice %1 {offsets = [0, 13], sizes = [8, 1], strides = [1, 1]} : vector<8x32xi32> to vector<8x1xi32>
    %246 = vector.broadcast %10 : vector<1x256xi32> to vector<8x256xi32>
    %247 = vector.broadcast %245 : vector<8x1xi32> to vector<8x256xi32>
    %248 = arith.cmpi eq, %246, %247 : vector<8x256xi32>
    %cst_49 = arith.constant 0.000000e+00 : f32
    %249 = vector.broadcast %cst_49 : f32 to vector<8x256xf32>
    %250 = arith.select %248, %7, %249 : vector<8x256xi1>, vector<8x256xf32>
    %cst_50 = arith.constant dense<0.000000e+00> : vector<8xf32>
    %251 = vector.multi_reduction <add>, %250, %cst_50 [1] : vector<8x256xf32> to vector<8xf32>
    %252 = vector.shape_cast %251 : vector<8xf32> to vector<8x1xf32>
    %c13_i32 = arith.constant 13 : i32
    %253 = vector.broadcast %c13_i32 : i32 to vector<1x32xi32>
    %254 = arith.cmpi eq, %2, %253 : vector<1x32xi32>
    %cst_51 = arith.constant 0.000000e+00 : f32
    %255 = vector.shape_cast %254 : vector<1x32xi1> to vector<1x32xi1>
    %256 = vector.broadcast %255 : vector<1x32xi1> to vector<8x32xi1>
    %257 = vector.shape_cast %252 : vector<8x1xf32> to vector<8x1xf32>
    %258 = vector.broadcast %257 : vector<8x1xf32> to vector<8x32xf32>
    %259 = vector.broadcast %cst_51 : f32 to vector<8x32xf32>
    %260 = arith.select %256, %258, %259 : vector<8x32xi1>, vector<8x32xf32>
    %261 = arith.addf %244, %260 : vector<8x32xf32>
    %262 = vector.extract_strided_slice %1 {offsets = [0, 14], sizes = [8, 1], strides = [1, 1]} : vector<8x32xi32> to vector<8x1xi32>
    %263 = vector.broadcast %10 : vector<1x256xi32> to vector<8x256xi32>
    %264 = vector.broadcast %262 : vector<8x1xi32> to vector<8x256xi32>
    %265 = arith.cmpi eq, %263, %264 : vector<8x256xi32>
    %cst_52 = arith.constant 0.000000e+00 : f32
    %266 = vector.broadcast %cst_52 : f32 to vector<8x256xf32>
    %267 = arith.select %265, %7, %266 : vector<8x256xi1>, vector<8x256xf32>
    %cst_53 = arith.constant dense<0.000000e+00> : vector<8xf32>
    %268 = vector.multi_reduction <add>, %267, %cst_53 [1] : vector<8x256xf32> to vector<8xf32>
    %269 = vector.shape_cast %268 : vector<8xf32> to vector<8x1xf32>
    %c14_i32 = arith.constant 14 : i32
    %270 = vector.broadcast %c14_i32 : i32 to vector<1x32xi32>
    %271 = arith.cmpi eq, %2, %270 : vector<1x32xi32>
    %cst_54 = arith.constant 0.000000e+00 : f32
    %272 = vector.shape_cast %271 : vector<1x32xi1> to vector<1x32xi1>
    %273 = vector.broadcast %272 : vector<1x32xi1> to vector<8x32xi1>
    %274 = vector.shape_cast %269 : vector<8x1xf32> to vector<8x1xf32>
    %275 = vector.broadcast %274 : vector<8x1xf32> to vector<8x32xf32>
    %276 = vector.broadcast %cst_54 : f32 to vector<8x32xf32>
    %277 = arith.select %273, %275, %276 : vector<8x32xi1>, vector<8x32xf32>
    %278 = arith.addf %261, %277 : vector<8x32xf32>
    %279 = vector.extract_strided_slice %1 {offsets = [0, 15], sizes = [8, 1], strides = [1, 1]} : vector<8x32xi32> to vector<8x1xi32>
    %280 = vector.broadcast %10 : vector<1x256xi32> to vector<8x256xi32>
    %281 = vector.broadcast %279 : vector<8x1xi32> to vector<8x256xi32>
    %282 = arith.cmpi eq, %280, %281 : vector<8x256xi32>
    %cst_55 = arith.constant 0.000000e+00 : f32
    %283 = vector.broadcast %cst_55 : f32 to vector<8x256xf32>
    %284 = arith.select %282, %7, %283 : vector<8x256xi1>, vector<8x256xf32>
    %cst_56 = arith.constant dense<0.000000e+00> : vector<8xf32>
    %285 = vector.multi_reduction <add>, %284, %cst_56 [1] : vector<8x256xf32> to vector<8xf32>
    %286 = vector.shape_cast %285 : vector<8xf32> to vector<8x1xf32>
    %c15_i32 = arith.constant 15 : i32
    %287 = vector.broadcast %c15_i32 : i32 to vector<1x32xi32>
    %288 = arith.cmpi eq, %2, %287 : vector<1x32xi32>
    %cst_57 = arith.constant 0.000000e+00 : f32
    %289 = vector.shape_cast %288 : vector<1x32xi1> to vector<1x32xi1>
    %290 = vector.broadcast %289 : vector<1x32xi1> to vector<8x32xi1>
    %291 = vector.shape_cast %286 : vector<8x1xf32> to vector<8x1xf32>
    %292 = vector.broadcast %291 : vector<8x1xf32> to vector<8x32xf32>
    %293 = vector.broadcast %cst_57 : f32 to vector<8x32xf32>
    %294 = arith.select %290, %292, %293 : vector<8x32xi1>, vector<8x32xf32>
    %295 = arith.addf %278, %294 : vector<8x32xf32>
    %296 = vector.extract_strided_slice %1 {offsets = [0, 16], sizes = [8, 1], strides = [1, 1]} : vector<8x32xi32> to vector<8x1xi32>
    %297 = vector.broadcast %10 : vector<1x256xi32> to vector<8x256xi32>
    %298 = vector.broadcast %296 : vector<8x1xi32> to vector<8x256xi32>
    %299 = arith.cmpi eq, %297, %298 : vector<8x256xi32>
    %cst_58 = arith.constant 0.000000e+00 : f32
    %300 = vector.broadcast %cst_58 : f32 to vector<8x256xf32>
    %301 = arith.select %299, %7, %300 : vector<8x256xi1>, vector<8x256xf32>
    %cst_59 = arith.constant dense<0.000000e+00> : vector<8xf32>
    %302 = vector.multi_reduction <add>, %301, %cst_59 [1] : vector<8x256xf32> to vector<8xf32>
    %303 = vector.shape_cast %302 : vector<8xf32> to vector<8x1xf32>
    %c16_i32 = arith.constant 16 : i32
    %304 = vector.broadcast %c16_i32 : i32 to vector<1x32xi32>
    %305 = arith.cmpi eq, %2, %304 : vector<1x32xi32>
    %cst_60 = arith.constant 0.000000e+00 : f32
    %306 = vector.shape_cast %305 : vector<1x32xi1> to vector<1x32xi1>
    %307 = vector.broadcast %306 : vector<1x32xi1> to vector<8x32xi1>
    %308 = vector.shape_cast %303 : vector<8x1xf32> to vector<8x1xf32>
    %309 = vector.broadcast %308 : vector<8x1xf32> to vector<8x32xf32>
    %310 = vector.broadcast %cst_60 : f32 to vector<8x32xf32>
    %311 = arith.select %307, %309, %310 : vector<8x32xi1>, vector<8x32xf32>
    %312 = arith.addf %295, %311 : vector<8x32xf32>
    %313 = vector.extract_strided_slice %1 {offsets = [0, 17], sizes = [8, 1], strides = [1, 1]} : vector<8x32xi32> to vector<8x1xi32>
    %314 = vector.broadcast %10 : vector<1x256xi32> to vector<8x256xi32>
    %315 = vector.broadcast %313 : vector<8x1xi32> to vector<8x256xi32>
    %316 = arith.cmpi eq, %314, %315 : vector<8x256xi32>
    %cst_61 = arith.constant 0.000000e+00 : f32
    %317 = vector.broadcast %cst_61 : f32 to vector<8x256xf32>
    %318 = arith.select %316, %7, %317 : vector<8x256xi1>, vector<8x256xf32>
    %cst_62 = arith.constant dense<0.000000e+00> : vector<8xf32>
    %319 = vector.multi_reduction <add>, %318, %cst_62 [1] : vector<8x256xf32> to vector<8xf32>
    %320 = vector.shape_cast %319 : vector<8xf32> to vector<8x1xf32>
    %c17_i32 = arith.constant 17 : i32
    %321 = vector.broadcast %c17_i32 : i32 to vector<1x32xi32>
    %322 = arith.cmpi eq, %2, %321 : vector<1x32xi32>
    %cst_63 = arith.constant 0.000000e+00 : f32
    %323 = vector.shape_cast %322 : vector<1x32xi1> to vector<1x32xi1>
    %324 = vector.broadcast %323 : vector<1x32xi1> to vector<8x32xi1>
    %325 = vector.shape_cast %320 : vector<8x1xf32> to vector<8x1xf32>
    %326 = vector.broadcast %325 : vector<8x1xf32> to vector<8x32xf32>
    %327 = vector.broadcast %cst_63 : f32 to vector<8x32xf32>
    %328 = arith.select %324, %326, %327 : vector<8x32xi1>, vector<8x32xf32>
    %329 = arith.addf %312, %328 : vector<8x32xf32>
    %330 = vector.extract_strided_slice %1 {offsets = [0, 18], sizes = [8, 1], strides = [1, 1]} : vector<8x32xi32> to vector<8x1xi32>
    %331 = vector.broadcast %10 : vector<1x256xi32> to vector<8x256xi32>
    %332 = vector.broadcast %330 : vector<8x1xi32> to vector<8x256xi32>
    %333 = arith.cmpi eq, %331, %332 : vector<8x256xi32>
    %cst_64 = arith.constant 0.000000e+00 : f32
    %334 = vector.broadcast %cst_64 : f32 to vector<8x256xf32>
    %335 = arith.select %333, %7, %334 : vector<8x256xi1>, vector<8x256xf32>
    %cst_65 = arith.constant dense<0.000000e+00> : vector<8xf32>
    %336 = vector.multi_reduction <add>, %335, %cst_65 [1] : vector<8x256xf32> to vector<8xf32>
    %337 = vector.shape_cast %336 : vector<8xf32> to vector<8x1xf32>
    %c18_i32 = arith.constant 18 : i32
    %338 = vector.broadcast %c18_i32 : i32 to vector<1x32xi32>
    %339 = arith.cmpi eq, %2, %338 : vector<1x32xi32>
    %cst_66 = arith.constant 0.000000e+00 : f32
    %340 = vector.shape_cast %339 : vector<1x32xi1> to vector<1x32xi1>
    %341 = vector.broadcast %340 : vector<1x32xi1> to vector<8x32xi1>
    %342 = vector.shape_cast %337 : vector<8x1xf32> to vector<8x1xf32>
    %343 = vector.broadcast %342 : vector<8x1xf32> to vector<8x32xf32>
    %344 = vector.broadcast %cst_66 : f32 to vector<8x32xf32>
    %345 = arith.select %341, %343, %344 : vector<8x32xi1>, vector<8x32xf32>
    %346 = arith.addf %329, %345 : vector<8x32xf32>
    %347 = vector.extract_strided_slice %1 {offsets = [0, 19], sizes = [8, 1], strides = [1, 1]} : vector<8x32xi32> to vector<8x1xi32>
    %348 = vector.broadcast %10 : vector<1x256xi32> to vector<8x256xi32>
    %349 = vector.broadcast %347 : vector<8x1xi32> to vector<8x256xi32>
    %350 = arith.cmpi eq, %348, %349 : vector<8x256xi32>
    %cst_67 = arith.constant 0.000000e+00 : f32
    %351 = vector.broadcast %cst_67 : f32 to vector<8x256xf32>
    %352 = arith.select %350, %7, %351 : vector<8x256xi1>, vector<8x256xf32>
    %cst_68 = arith.constant dense<0.000000e+00> : vector<8xf32>
    %353 = vector.multi_reduction <add>, %352, %cst_68 [1] : vector<8x256xf32> to vector<8xf32>
    %354 = vector.shape_cast %353 : vector<8xf32> to vector<8x1xf32>
    %c19_i32 = arith.constant 19 : i32
    %355 = vector.broadcast %c19_i32 : i32 to vector<1x32xi32>
    %356 = arith.cmpi eq, %2, %355 : vector<1x32xi32>
    %cst_69 = arith.constant 0.000000e+00 : f32
    %357 = vector.shape_cast %356 : vector<1x32xi1> to vector<1x32xi1>
    %358 = vector.broadcast %357 : vector<1x32xi1> to vector<8x32xi1>
    %359 = vector.shape_cast %354 : vector<8x1xf32> to vector<8x1xf32>
    %360 = vector.broadcast %359 : vector<8x1xf32> to vector<8x32xf32>
    %361 = vector.broadcast %cst_69 : f32 to vector<8x32xf32>
    %362 = arith.select %358, %360, %361 : vector<8x32xi1>, vector<8x32xf32>
    %363 = arith.addf %346, %362 : vector<8x32xf32>
    %364 = vector.extract_strided_slice %1 {offsets = [0, 20], sizes = [8, 1], strides = [1, 1]} : vector<8x32xi32> to vector<8x1xi32>
    %365 = vector.broadcast %10 : vector<1x256xi32> to vector<8x256xi32>
    %366 = vector.broadcast %364 : vector<8x1xi32> to vector<8x256xi32>
    %367 = arith.cmpi eq, %365, %366 : vector<8x256xi32>
    %cst_70 = arith.constant 0.000000e+00 : f32
    %368 = vector.broadcast %cst_70 : f32 to vector<8x256xf32>
    %369 = arith.select %367, %7, %368 : vector<8x256xi1>, vector<8x256xf32>
    %cst_71 = arith.constant dense<0.000000e+00> : vector<8xf32>
    %370 = vector.multi_reduction <add>, %369, %cst_71 [1] : vector<8x256xf32> to vector<8xf32>
    %371 = vector.shape_cast %370 : vector<8xf32> to vector<8x1xf32>
    %c20_i32 = arith.constant 20 : i32
    %372 = vector.broadcast %c20_i32 : i32 to vector<1x32xi32>
    %373 = arith.cmpi eq, %2, %372 : vector<1x32xi32>
    %cst_72 = arith.constant 0.000000e+00 : f32
    %374 = vector.shape_cast %373 : vector<1x32xi1> to vector<1x32xi1>
    %375 = vector.broadcast %374 : vector<1x32xi1> to vector<8x32xi1>
    %376 = vector.shape_cast %371 : vector<8x1xf32> to vector<8x1xf32>
    %377 = vector.broadcast %376 : vector<8x1xf32> to vector<8x32xf32>
    %378 = vector.broadcast %cst_72 : f32 to vector<8x32xf32>
    %379 = arith.select %375, %377, %378 : vector<8x32xi1>, vector<8x32xf32>
    %380 = arith.addf %363, %379 : vector<8x32xf32>
    %381 = vector.extract_strided_slice %1 {offsets = [0, 21], sizes = [8, 1], strides = [1, 1]} : vector<8x32xi32> to vector<8x1xi32>
    %382 = vector.broadcast %10 : vector<1x256xi32> to vector<8x256xi32>
    %383 = vector.broadcast %381 : vector<8x1xi32> to vector<8x256xi32>
    %384 = arith.cmpi eq, %382, %383 : vector<8x256xi32>
    %cst_73 = arith.constant 0.000000e+00 : f32
    %385 = vector.broadcast %cst_73 : f32 to vector<8x256xf32>
    %386 = arith.select %384, %7, %385 : vector<8x256xi1>, vector<8x256xf32>
    %cst_74 = arith.constant dense<0.000000e+00> : vector<8xf32>
    %387 = vector.multi_reduction <add>, %386, %cst_74 [1] : vector<8x256xf32> to vector<8xf32>
    %388 = vector.shape_cast %387 : vector<8xf32> to vector<8x1xf32>
    %c21_i32 = arith.constant 21 : i32
    %389 = vector.broadcast %c21_i32 : i32 to vector<1x32xi32>
    %390 = arith.cmpi eq, %2, %389 : vector<1x32xi32>
    %cst_75 = arith.constant 0.000000e+00 : f32
    %391 = vector.shape_cast %390 : vector<1x32xi1> to vector<1x32xi1>
    %392 = vector.broadcast %391 : vector<1x32xi1> to vector<8x32xi1>
    %393 = vector.shape_cast %388 : vector<8x1xf32> to vector<8x1xf32>
    %394 = vector.broadcast %393 : vector<8x1xf32> to vector<8x32xf32>
    %395 = vector.broadcast %cst_75 : f32 to vector<8x32xf32>
    %396 = arith.select %392, %394, %395 : vector<8x32xi1>, vector<8x32xf32>
    %397 = arith.addf %380, %396 : vector<8x32xf32>
    %398 = vector.extract_strided_slice %1 {offsets = [0, 22], sizes = [8, 1], strides = [1, 1]} : vector<8x32xi32> to vector<8x1xi32>
    %399 = vector.broadcast %10 : vector<1x256xi32> to vector<8x256xi32>
    %400 = vector.broadcast %398 : vector<8x1xi32> to vector<8x256xi32>
    %401 = arith.cmpi eq, %399, %400 : vector<8x256xi32>
    %cst_76 = arith.constant 0.000000e+00 : f32
    %402 = vector.broadcast %cst_76 : f32 to vector<8x256xf32>
    %403 = arith.select %401, %7, %402 : vector<8x256xi1>, vector<8x256xf32>
    %cst_77 = arith.constant dense<0.000000e+00> : vector<8xf32>
    %404 = vector.multi_reduction <add>, %403, %cst_77 [1] : vector<8x256xf32> to vector<8xf32>
    %405 = vector.shape_cast %404 : vector<8xf32> to vector<8x1xf32>
    %c22_i32 = arith.constant 22 : i32
    %406 = vector.broadcast %c22_i32 : i32 to vector<1x32xi32>
    %407 = arith.cmpi eq, %2, %406 : vector<1x32xi32>
    %cst_78 = arith.constant 0.000000e+00 : f32
    %408 = vector.shape_cast %407 : vector<1x32xi1> to vector<1x32xi1>
    %409 = vector.broadcast %408 : vector<1x32xi1> to vector<8x32xi1>
    %410 = vector.shape_cast %405 : vector<8x1xf32> to vector<8x1xf32>
    %411 = vector.broadcast %410 : vector<8x1xf32> to vector<8x32xf32>
    %412 = vector.broadcast %cst_78 : f32 to vector<8x32xf32>
    %413 = arith.select %409, %411, %412 : vector<8x32xi1>, vector<8x32xf32>
    %414 = arith.addf %397, %413 : vector<8x32xf32>
    %415 = vector.extract_strided_slice %1 {offsets = [0, 23], sizes = [8, 1], strides = [1, 1]} : vector<8x32xi32> to vector<8x1xi32>
    %416 = vector.broadcast %10 : vector<1x256xi32> to vector<8x256xi32>
    %417 = vector.broadcast %415 : vector<8x1xi32> to vector<8x256xi32>
    %418 = arith.cmpi eq, %416, %417 : vector<8x256xi32>
    %cst_79 = arith.constant 0.000000e+00 : f32
    %419 = vector.broadcast %cst_79 : f32 to vector<8x256xf32>
    %420 = arith.select %418, %7, %419 : vector<8x256xi1>, vector<8x256xf32>
    %cst_80 = arith.constant dense<0.000000e+00> : vector<8xf32>
    %421 = vector.multi_reduction <add>, %420, %cst_80 [1] : vector<8x256xf32> to vector<8xf32>
    %422 = vector.shape_cast %421 : vector<8xf32> to vector<8x1xf32>
    %c23_i32 = arith.constant 23 : i32
    %423 = vector.broadcast %c23_i32 : i32 to vector<1x32xi32>
    %424 = arith.cmpi eq, %2, %423 : vector<1x32xi32>
    %cst_81 = arith.constant 0.000000e+00 : f32
    %425 = vector.shape_cast %424 : vector<1x32xi1> to vector<1x32xi1>
    %426 = vector.broadcast %425 : vector<1x32xi1> to vector<8x32xi1>
    %427 = vector.shape_cast %422 : vector<8x1xf32> to vector<8x1xf32>
    %428 = vector.broadcast %427 : vector<8x1xf32> to vector<8x32xf32>
    %429 = vector.broadcast %cst_81 : f32 to vector<8x32xf32>
    %430 = arith.select %426, %428, %429 : vector<8x32xi1>, vector<8x32xf32>
    %431 = arith.addf %414, %430 : vector<8x32xf32>
    %432 = vector.extract_strided_slice %1 {offsets = [0, 24], sizes = [8, 1], strides = [1, 1]} : vector<8x32xi32> to vector<8x1xi32>
    %433 = vector.broadcast %10 : vector<1x256xi32> to vector<8x256xi32>
    %434 = vector.broadcast %432 : vector<8x1xi32> to vector<8x256xi32>
    %435 = arith.cmpi eq, %433, %434 : vector<8x256xi32>
    %cst_82 = arith.constant 0.000000e+00 : f32
    %436 = vector.broadcast %cst_82 : f32 to vector<8x256xf32>
    %437 = arith.select %435, %7, %436 : vector<8x256xi1>, vector<8x256xf32>
    %cst_83 = arith.constant dense<0.000000e+00> : vector<8xf32>
    %438 = vector.multi_reduction <add>, %437, %cst_83 [1] : vector<8x256xf32> to vector<8xf32>
    %439 = vector.shape_cast %438 : vector<8xf32> to vector<8x1xf32>
    %c24_i32 = arith.constant 24 : i32
    %440 = vector.broadcast %c24_i32 : i32 to vector<1x32xi32>
    %441 = arith.cmpi eq, %2, %440 : vector<1x32xi32>
    %cst_84 = arith.constant 0.000000e+00 : f32
    %442 = vector.shape_cast %441 : vector<1x32xi1> to vector<1x32xi1>
    %443 = vector.broadcast %442 : vector<1x32xi1> to vector<8x32xi1>
    %444 = vector.shape_cast %439 : vector<8x1xf32> to vector<8x1xf32>
    %445 = vector.broadcast %444 : vector<8x1xf32> to vector<8x32xf32>
    %446 = vector.broadcast %cst_84 : f32 to vector<8x32xf32>
    %447 = arith.select %443, %445, %446 : vector<8x32xi1>, vector<8x32xf32>
    %448 = arith.addf %431, %447 : vector<8x32xf32>
    %449 = vector.extract_strided_slice %1 {offsets = [0, 25], sizes = [8, 1], strides = [1, 1]} : vector<8x32xi32> to vector<8x1xi32>
    %450 = vector.broadcast %10 : vector<1x256xi32> to vector<8x256xi32>
    %451 = vector.broadcast %449 : vector<8x1xi32> to vector<8x256xi32>
    %452 = arith.cmpi eq, %450, %451 : vector<8x256xi32>
    %cst_85 = arith.constant 0.000000e+00 : f32
    %453 = vector.broadcast %cst_85 : f32 to vector<8x256xf32>
    %454 = arith.select %452, %7, %453 : vector<8x256xi1>, vector<8x256xf32>
    %cst_86 = arith.constant dense<0.000000e+00> : vector<8xf32>
    %455 = vector.multi_reduction <add>, %454, %cst_86 [1] : vector<8x256xf32> to vector<8xf32>
    %456 = vector.shape_cast %455 : vector<8xf32> to vector<8x1xf32>
    %c25_i32 = arith.constant 25 : i32
    %457 = vector.broadcast %c25_i32 : i32 to vector<1x32xi32>
    %458 = arith.cmpi eq, %2, %457 : vector<1x32xi32>
    %cst_87 = arith.constant 0.000000e+00 : f32
    %459 = vector.shape_cast %458 : vector<1x32xi1> to vector<1x32xi1>
    %460 = vector.broadcast %459 : vector<1x32xi1> to vector<8x32xi1>
    %461 = vector.shape_cast %456 : vector<8x1xf32> to vector<8x1xf32>
    %462 = vector.broadcast %461 : vector<8x1xf32> to vector<8x32xf32>
    %463 = vector.broadcast %cst_87 : f32 to vector<8x32xf32>
    %464 = arith.select %460, %462, %463 : vector<8x32xi1>, vector<8x32xf32>
    %465 = arith.addf %448, %464 : vector<8x32xf32>
    %466 = vector.extract_strided_slice %1 {offsets = [0, 26], sizes = [8, 1], strides = [1, 1]} : vector<8x32xi32> to vector<8x1xi32>
    %467 = vector.broadcast %10 : vector<1x256xi32> to vector<8x256xi32>
    %468 = vector.broadcast %466 : vector<8x1xi32> to vector<8x256xi32>
    %469 = arith.cmpi eq, %467, %468 : vector<8x256xi32>
    %cst_88 = arith.constant 0.000000e+00 : f32
    %470 = vector.broadcast %cst_88 : f32 to vector<8x256xf32>
    %471 = arith.select %469, %7, %470 : vector<8x256xi1>, vector<8x256xf32>
    %cst_89 = arith.constant dense<0.000000e+00> : vector<8xf32>
    %472 = vector.multi_reduction <add>, %471, %cst_89 [1] : vector<8x256xf32> to vector<8xf32>
    %473 = vector.shape_cast %472 : vector<8xf32> to vector<8x1xf32>
    %c26_i32 = arith.constant 26 : i32
    %474 = vector.broadcast %c26_i32 : i32 to vector<1x32xi32>
    %475 = arith.cmpi eq, %2, %474 : vector<1x32xi32>
    %cst_90 = arith.constant 0.000000e+00 : f32
    %476 = vector.shape_cast %475 : vector<1x32xi1> to vector<1x32xi1>
    %477 = vector.broadcast %476 : vector<1x32xi1> to vector<8x32xi1>
    %478 = vector.shape_cast %473 : vector<8x1xf32> to vector<8x1xf32>
    %479 = vector.broadcast %478 : vector<8x1xf32> to vector<8x32xf32>
    %480 = vector.broadcast %cst_90 : f32 to vector<8x32xf32>
    %481 = arith.select %477, %479, %480 : vector<8x32xi1>, vector<8x32xf32>
    %482 = arith.addf %465, %481 : vector<8x32xf32>
    %483 = vector.extract_strided_slice %1 {offsets = [0, 27], sizes = [8, 1], strides = [1, 1]} : vector<8x32xi32> to vector<8x1xi32>
    %484 = vector.broadcast %10 : vector<1x256xi32> to vector<8x256xi32>
    %485 = vector.broadcast %483 : vector<8x1xi32> to vector<8x256xi32>
    %486 = arith.cmpi eq, %484, %485 : vector<8x256xi32>
    %cst_91 = arith.constant 0.000000e+00 : f32
    %487 = vector.broadcast %cst_91 : f32 to vector<8x256xf32>
    %488 = arith.select %486, %7, %487 : vector<8x256xi1>, vector<8x256xf32>
    %cst_92 = arith.constant dense<0.000000e+00> : vector<8xf32>
    %489 = vector.multi_reduction <add>, %488, %cst_92 [1] : vector<8x256xf32> to vector<8xf32>
    %490 = vector.shape_cast %489 : vector<8xf32> to vector<8x1xf32>
    %c27_i32 = arith.constant 27 : i32
    %491 = vector.broadcast %c27_i32 : i32 to vector<1x32xi32>
    %492 = arith.cmpi eq, %2, %491 : vector<1x32xi32>
    %cst_93 = arith.constant 0.000000e+00 : f32
    %493 = vector.shape_cast %492 : vector<1x32xi1> to vector<1x32xi1>
    %494 = vector.broadcast %493 : vector<1x32xi1> to vector<8x32xi1>
    %495 = vector.shape_cast %490 : vector<8x1xf32> to vector<8x1xf32>
    %496 = vector.broadcast %495 : vector<8x1xf32> to vector<8x32xf32>
    %497 = vector.broadcast %cst_93 : f32 to vector<8x32xf32>
    %498 = arith.select %494, %496, %497 : vector<8x32xi1>, vector<8x32xf32>
    %499 = arith.addf %482, %498 : vector<8x32xf32>
    %500 = vector.extract_strided_slice %1 {offsets = [0, 28], sizes = [8, 1], strides = [1, 1]} : vector<8x32xi32> to vector<8x1xi32>
    %501 = vector.broadcast %10 : vector<1x256xi32> to vector<8x256xi32>
    %502 = vector.broadcast %500 : vector<8x1xi32> to vector<8x256xi32>
    %503 = arith.cmpi eq, %501, %502 : vector<8x256xi32>
    %cst_94 = arith.constant 0.000000e+00 : f32
    %504 = vector.broadcast %cst_94 : f32 to vector<8x256xf32>
    %505 = arith.select %503, %7, %504 : vector<8x256xi1>, vector<8x256xf32>
    %cst_95 = arith.constant dense<0.000000e+00> : vector<8xf32>
    %506 = vector.multi_reduction <add>, %505, %cst_95 [1] : vector<8x256xf32> to vector<8xf32>
    %507 = vector.shape_cast %506 : vector<8xf32> to vector<8x1xf32>
    %c28_i32 = arith.constant 28 : i32
    %508 = vector.broadcast %c28_i32 : i32 to vector<1x32xi32>
    %509 = arith.cmpi eq, %2, %508 : vector<1x32xi32>
    %cst_96 = arith.constant 0.000000e+00 : f32
    %510 = vector.shape_cast %509 : vector<1x32xi1> to vector<1x32xi1>
    %511 = vector.broadcast %510 : vector<1x32xi1> to vector<8x32xi1>
    %512 = vector.shape_cast %507 : vector<8x1xf32> to vector<8x1xf32>
    %513 = vector.broadcast %512 : vector<8x1xf32> to vector<8x32xf32>
    %514 = vector.broadcast %cst_96 : f32 to vector<8x32xf32>
    %515 = arith.select %511, %513, %514 : vector<8x32xi1>, vector<8x32xf32>
    %516 = arith.addf %499, %515 : vector<8x32xf32>
    %517 = vector.extract_strided_slice %1 {offsets = [0, 29], sizes = [8, 1], strides = [1, 1]} : vector<8x32xi32> to vector<8x1xi32>
    %518 = vector.broadcast %10 : vector<1x256xi32> to vector<8x256xi32>
    %519 = vector.broadcast %517 : vector<8x1xi32> to vector<8x256xi32>
    %520 = arith.cmpi eq, %518, %519 : vector<8x256xi32>
    %cst_97 = arith.constant 0.000000e+00 : f32
    %521 = vector.broadcast %cst_97 : f32 to vector<8x256xf32>
    %522 = arith.select %520, %7, %521 : vector<8x256xi1>, vector<8x256xf32>
    %cst_98 = arith.constant dense<0.000000e+00> : vector<8xf32>
    %523 = vector.multi_reduction <add>, %522, %cst_98 [1] : vector<8x256xf32> to vector<8xf32>
    %524 = vector.shape_cast %523 : vector<8xf32> to vector<8x1xf32>
    %c29_i32 = arith.constant 29 : i32
    %525 = vector.broadcast %c29_i32 : i32 to vector<1x32xi32>
    %526 = arith.cmpi eq, %2, %525 : vector<1x32xi32>
    %cst_99 = arith.constant 0.000000e+00 : f32
    %527 = vector.shape_cast %526 : vector<1x32xi1> to vector<1x32xi1>
    %528 = vector.broadcast %527 : vector<1x32xi1> to vector<8x32xi1>
    %529 = vector.shape_cast %524 : vector<8x1xf32> to vector<8x1xf32>
    %530 = vector.broadcast %529 : vector<8x1xf32> to vector<8x32xf32>
    %531 = vector.broadcast %cst_99 : f32 to vector<8x32xf32>
    %532 = arith.select %528, %530, %531 : vector<8x32xi1>, vector<8x32xf32>
    %533 = arith.addf %516, %532 : vector<8x32xf32>
    %534 = vector.extract_strided_slice %1 {offsets = [0, 30], sizes = [8, 1], strides = [1, 1]} : vector<8x32xi32> to vector<8x1xi32>
    %535 = vector.broadcast %10 : vector<1x256xi32> to vector<8x256xi32>
    %536 = vector.broadcast %534 : vector<8x1xi32> to vector<8x256xi32>
    %537 = arith.cmpi eq, %535, %536 : vector<8x256xi32>
    %cst_100 = arith.constant 0.000000e+00 : f32
    %538 = vector.broadcast %cst_100 : f32 to vector<8x256xf32>
    %539 = arith.select %537, %7, %538 : vector<8x256xi1>, vector<8x256xf32>
    %cst_101 = arith.constant dense<0.000000e+00> : vector<8xf32>
    %540 = vector.multi_reduction <add>, %539, %cst_101 [1] : vector<8x256xf32> to vector<8xf32>
    %541 = vector.shape_cast %540 : vector<8xf32> to vector<8x1xf32>
    %c30_i32 = arith.constant 30 : i32
    %542 = vector.broadcast %c30_i32 : i32 to vector<1x32xi32>
    %543 = arith.cmpi eq, %2, %542 : vector<1x32xi32>
    %cst_102 = arith.constant 0.000000e+00 : f32
    %544 = vector.shape_cast %543 : vector<1x32xi1> to vector<1x32xi1>
    %545 = vector.broadcast %544 : vector<1x32xi1> to vector<8x32xi1>
    %546 = vector.shape_cast %541 : vector<8x1xf32> to vector<8x1xf32>
    %547 = vector.broadcast %546 : vector<8x1xf32> to vector<8x32xf32>
    %548 = vector.broadcast %cst_102 : f32 to vector<8x32xf32>
    %549 = arith.select %545, %547, %548 : vector<8x32xi1>, vector<8x32xf32>
    %550 = arith.addf %533, %549 : vector<8x32xf32>
    %551 = vector.extract_strided_slice %1 {offsets = [0, 31], sizes = [8, 1], strides = [1, 1]} : vector<8x32xi32> to vector<8x1xi32>
    %552 = vector.broadcast %10 : vector<1x256xi32> to vector<8x256xi32>
    %553 = vector.broadcast %551 : vector<8x1xi32> to vector<8x256xi32>
    %554 = arith.cmpi eq, %552, %553 : vector<8x256xi32>
    %cst_103 = arith.constant 0.000000e+00 : f32
    %555 = vector.broadcast %cst_103 : f32 to vector<8x256xf32>
    %556 = arith.select %554, %7, %555 : vector<8x256xi1>, vector<8x256xf32>
    %cst_104 = arith.constant dense<0.000000e+00> : vector<8xf32>
    %557 = vector.multi_reduction <add>, %556, %cst_104 [1] : vector<8x256xf32> to vector<8xf32>
    %558 = vector.shape_cast %557 : vector<8xf32> to vector<8x1xf32>
    %c31_i32 = arith.constant 31 : i32
    %559 = vector.broadcast %c31_i32 : i32 to vector<1x32xi32>
    %560 = arith.cmpi eq, %2, %559 : vector<1x32xi32>
    %cst_105 = arith.constant 0.000000e+00 : f32
    %561 = vector.shape_cast %560 : vector<1x32xi1> to vector<1x32xi1>
    %562 = vector.broadcast %561 : vector<1x32xi1> to vector<8x32xi1>
    %563 = vector.shape_cast %558 : vector<8x1xf32> to vector<8x1xf32>
    %564 = vector.broadcast %563 : vector<8x1xf32> to vector<8x32xf32>
    %565 = vector.broadcast %cst_105 : f32 to vector<8x32xf32>
    %566 = arith.select %562, %564, %565 : vector<8x32xi1>, vector<8x32xf32>
    %567 = arith.addf %550, %566 : vector<8x32xf32>
    %c0_i32_106 = arith.constant 0 : i32
    %568 = vector.broadcast %c0_i32_106 : i32 to vector<8x32xi32>
    %569 = arith.cmpi slt, %1, %568 : vector<8x32xi32>
    %c16_i32_107 = arith.constant 16 : i32
    %570 = vector.broadcast %c16_i32_107 : i32 to vector<1x32xi32>
    %571 = arith.cmpi sge, %2, %570 : vector<1x32xi32>
    %572 = vector.broadcast %571 : vector<1x32xi1> to vector<8x32xi1>
    %573 = arith.andi %569, %572 : vector<8x32xi1>
    %574 = vector.shape_cast %23 : vector<8x1xf32> to vector<8x1xf32>
    %575 = vector.broadcast %574 : vector<8x1xf32> to vector<8x32xf32>
    %576 = arith.select %573, %575, %567 : vector<8x32xi1>, vector<8x32xf32>
    %577 = tpu.bitcast %22 : vector<8x1xi32> -> vector<8x1xf32>
    %cst_108 = arith.constant 0.000000e+00 : f32
    %578 = vector.broadcast %cst_108 : f32 to vector<8x95xf32>
    %579 = tpu.concatenate %576, %577, %578 in 1 : vector<8x32xf32>, vector<8x1xf32>, vector<8x95xf32> -> vector<8x128xf32>
    %c0_109 = arith.constant 0 : index
    %c0_110 = arith.constant 0 : index
    %c0_111 = arith.constant 0 : index
    %580 = vector.load %arg3[%c0_109, %c0_110, %c0_111] : memref<1x8x128xf32, #tpu.memory_space<vmem>>, vector<1x8x128xf32>
    %581 = vector.shape_cast %580 : vector<1x8x128xf32> to vector<8x128xf32>
    %582 = vector.shape_cast %579 : vector<8x128xf32> to vector<1x8x128xf32>
    tpu.vector_store %arg3[%c0_109, %c0_110, %c0_111], %582 {strides = array<i32>} : memref<1x8x128xf32, #tpu.memory_space<vmem>>, vector<1x8x128xf32>,
    return
  }
  func.func @transform_0(%arg0: i32) -> (i32, i32, i32) {
    %c0_i32 = arith.constant 0 : i32
    %c0_i32_0 = arith.constant 0 : i32
    %c0_i32_1 = arith.constant 0 : i32
    return %arg0, %c0_i32, %c0_i32_0 : i32, i32, i32
  }
  func.func @transform_1(%arg0: i32) -> (i32, i32, i32) {
    %c0_i32 = arith.constant 0 : i32
    %c0_i32_0 = arith.constant 0 : i32
    %c0_i32_1 = arith.constant 0 : i32
    return %arg0, %c0_i32, %c0_i32_0 : i32, i32, i32
  }
  func.func @transform_2(%arg0: i32) -> (i32, i32, i32) {
    %c0_i32 = arith.constant 0 : i32
    %c0_i32_0 = arith.constant 0 : i32
    %c0_i32_1 = arith.constant 0 : i32
    return %arg0, %c0_i32, %c0_i32_0 : i32, i32, i32
  }
}

</mosaic_0001>

<llo_original>
// kernel: tpu_custom_call.1
$region0: #{tpu_custom_call.1}
  #allocation0 [shape = 'u32[]', space=smem, size = 0x4, offset = 0x4, fixed_abs, tag = 'smem constant byte address 0x4 - core index']
  #allocation1 [shape = 'u32[144,128]{1,0:T(1,128)}', space=vmem, size = 0x12000, scoped, tag = 'internal scratch']
  %s0 = inlined_call_operand.hbm [shape: f32[1,8,256], index: 0, kind: input, shape index: {}]
  %s1 = inlined_call_operand.hbm [shape: s32[1,8,32], index: 1, kind: input, shape index: {}]
  %s2 = inlined_call_operand.hbm [shape: f32[1,8,128], index: 2, kind: output, shape index: {}]
  %s3 = sld [smem:[#allocation0]]
  $region26: #{tpu_custom_call.1} parent=0
    _
  %s5 = ssub.s32 1, %s3
  %s6 = scalar_select 0, %s5, %s3
  $region1: #{tpu_custom_call.1} parent=0
    #allocation2 [shape = 'u8[8192]{0}', space=vmem, size = 0x2000, scoped, tag = 'input window, operand 0, single buffered']
    #allocation3 [shape = 's32[1]{0}', space=sflag, size = 0x4, scoped, tag = 'scoped memory for tpu_custom_call.1']
    #allocation4 [shape = 's32[1]{0}', space=sflag, size = 0x4, scoped, tag = 'scoped memory for tpu_custom_call.1']
    #allocation5 [shape = 'u8[4096]{0}', space=vmem, size = 0x1000, scoped, tag = 'input window, operand 1, single buffered']
    #allocation6 [shape = 's32[1]{0}', space=sflag, size = 0x4, scoped, tag = 'scoped memory for tpu_custom_call.1']
    #allocation7 [shape = 'u8[4096]{0}', space=vmem, size = 0x1000, scoped, tag = 'output window, operand 0, single buffered']
    %7 = vsyncpa [#allocation3], 0
    %8 = vsyncpa [#allocation6], 0
    %9 = vsyncpa [#allocation4], 0
    // Predicated region
    $region2: #{tpu_custom_call.1} parent=1 // pred_check
      _
    $region3: #{tpu_custom_call.1} parent=1 // pred_check_branch
      %11 = sbr.rel (0) target = $region5
    $region4: #{tpu_custom_call.1} parent=1 // pred_region
      %s13 = ssub.s32 256, 256
      %14 = vsyncadd [#allocation3], %s13
      %s16 = sshll.u32 [#allocation2], 4
      %s17 = int_to_ptr.vmem [resolvable:$true] %s16
      %19 = dma.hbm_to_vmem [thread:$0]  %s0, 256, %s17, [#allocation3]
    $region5: #{tpu_custom_call.1} parent=1 // pred_fallthru
      _
    // Predicated region
    $region6: #{tpu_custom_call.1} parent=1 // pred_check
      _
    $region7: #{tpu_custom_call.1} parent=1 // pred_check_branch
      %21 = sbr.rel (0) target = $region9
    $region8: #{tpu_custom_call.1} parent=1 // pred_region
      %s23 = ssub.s32 128, 128
      %24 = vsyncadd [#allocation6], %s23
      %s26 = sshll.u32 [#allocation5], 4
      %s27 = int_to_ptr.vmem [resolvable:$true] %s26
      %29 = dma.hbm_to_vmem [thread:$0]  %s1, 128, %s27, [#allocation6]
    $region9: #{tpu_custom_call.1} parent=1 // pred_fallthru
      _
    // Predicated region
    $region10: #{tpu_custom_call.1} parent=1 // pred_check
      _
    $region11: #{tpu_custom_call.1} parent=1 // pred_check_branch
      %31 = sbr.rel (0) target = $region13
    $region12: #{tpu_custom_call.1} parent=1 // pred_region
      %32 = dma.done [#allocation3], 256
    $region13: #{tpu_custom_call.1} parent=1 // pred_fallthru
      _
    // Predicated region
    $region14: #{tpu_custom_call.1} parent=1 // pred_check
      _
    $region15: #{tpu_custom_call.1} parent=1 // pred_check_branch
      %34 = sbr.rel (0) target = $region17
    $region16: #{tpu_custom_call.1} parent=1 // pred_region
      %35 = dma.done [#allocation6], 128
    $region17: #{tpu_custom_call.1} parent=1 // pred_fallthru
      _
    %v36 = vld [vmem:[#allocation5] sm:$0xff]
    %v37 = vlaneseq
    %v38 = vand.u32 %v37, 127
    %v39 = vld [vmem:[#allocation2] sm:$0xff]
    %v40 = vld [vmem:[#allocation2 + $0x8] sm:$0xff]
    %v41 = vadd.s32 %v38, 128
    %v42 = vmax.f32 %v39, %v40
    %43 = vmax.xlane.f32.xlu0 %v42
    %v44 = vpop.xlane.xlu0 %43
    %vm45 = vcmp.eq.f32.partialorder %v39, %v44
    %vm46 = vcmp.eq.f32.partialorder %v40, %v44
    %v47 = vsel %vm45, %v38, 256
    %v48 = vsel %vm46, %v41, 256
    %vm49 = vcmp.lt.s32.totalorder %v47, %v48
    %v50 = vsel %vm49, %v47, %v48
    %v51 = vand.u32 %v50, 65535
    %v52 = vshra.s32 %v50, 16
    %v53 = vcvt.s32.f32 %v51
    %v54 = vcvt.s32.f32 %v52
    %55 = vmin.xlane.f32.xlu0 %v54
    %v56 = vpop.xlane.xlu0 %55
    %vm57 = vcmp.eq.f32.partialorder %v54, %v56
    %v58 = vsel %vm57, %v53, inf
    %59 = vmin.xlane.f32.xlu0 %v58
    %v60 = vpop.xlane.xlu0 %59
    %v61 = vcvt.f32.s32 %v60
    %v62 = vcvt.f32.s32 %v56
    %v63 = vshll.u32 %v62, 16
    %v64 = vadd.s32 %v63, %v61
    %vm65 = vcmp.gt.f32.partialorder %v44, -inf
    %v66 = vsel %vm65, %v64, 0
    %67 = vset.pattern.permute.xlu0 0
    %68 = vperm.xlu0 %67, %v36
    %v69 = vpop.permute.xlu0 %68
    %vm70 = vcmp.eq.s32.totalorder %v38, %v69
    %vm71 = vcmp.eq.s32.totalorder %v41, %v69
    %v72 = vsel %vm70, %v39, 0.0
    %v73 = vsel %vm71, %v40, 0.0
    %v74 = vadd.f32 %v72, %v73
    %75 = vadd.xlane.f32.xlu0 %v74
    %v76 = vpop.xlane.xlu0 %75
    %vm77 = vcmp.eq.s32.totalorder %v38, 0
    %v78 = vsel %vm77, 1, 0
    %vm79 = vcmp.eq.s32.totalorder %v78, 1
    %v80 = vsel %vm79, %v76, 0.0
    %v81 = vadd.f32 %v80, 0.0
    %82 = vset.pattern.permute.xlu0 1
    %83 = vperm.xlu0 %82, %v36
    %v84 = vpop.permute.xlu0 %83
    %vm85 = vcmp.eq.s32.totalorder %v38, %v84
    %vm86 = vcmp.eq.s32.totalorder %v41, %v84
    %v87 = vsel %vm85, %v39, 0.0
    %v88 = vsel %vm86, %v40, 0.0
    %v89 = vadd.f32 %v87, %v88
    %90 = vadd.xlane.f32.xlu0 %v89
    %v91 = vpop.xlane.xlu0 %90
    %vm92 = vcmp.eq.s32.totalorder %v38, 1
    %v93 = vsel %vm92, 1, 0
    %vm94 = vcmp.eq.s32.totalorder %v93, 1
    %v95 = vsel %vm94, %v91, 0.0
    %v96 = vadd.f32 %v81, %v95
    %97 = vset.pattern.permute.xlu0 2
    %98 = vperm.xlu0 %97, %v36
    %v99 = vpop.permute.xlu0 %98
    %vm100 = vcmp.eq.s32.totalorder %v38, %v99
    %vm101 = vcmp.eq.s32.totalorder %v41, %v99
    %v102 = vsel %vm100, %v39, 0.0
    %v103 = vsel %vm101, %v40, 0.0
    %v104 = vadd.f32 %v102, %v103
    %105 = vadd.xlane.f32.xlu0 %v104
    %v106 = vpop.xlane.xlu0 %105
    %vm107 = vcmp.eq.s32.totalorder %v38, 2
    %v108 = vsel %vm107, 1, 0
    %vm109 = vcmp.eq.s32.totalorder %v108, 1
    %v110 = vsel %vm109, %v106, 0.0
    %v111 = vadd.f32 %v96, %v110
    %112 = vset.pattern.permute.xlu0 3
    %113 = vperm.xlu0 %112, %v36
    %v114 = vpop.permute.xlu0 %113
    %vm115 = vcmp.eq.s32.totalorder %v38, %v114
    %vm116 = vcmp.eq.s32.totalorder %v41, %v114
    %v117 = vsel %vm115, %v39, 0.0
    %v118 = vsel %vm116, %v40, 0.0
    %v119 = vadd.f32 %v117, %v118
    %120 = vadd.xlane.f32.xlu0 %v119
    %v121 = vpop.xlane.xlu0 %120
    %vm122 = vcmp.eq.s32.totalorder %v38, 3
    %v123 = vsel %vm122, 1, 0
    %vm124 = vcmp.eq.s32.totalorder %v123, 1
    %v125 = vsel %vm124, %v121, 0.0
    %v126 = vadd.f32 %v111, %v125
    %127 = vset.pattern.permute.xlu0 4
    %128 = vperm.xlu0 %127, %v36
    %v129 = vpop.permute.xlu0 %128
    %vm130 = vcmp.eq.s32.totalorder %v38, %v129
    %vm131 = vcmp.eq.s32.totalorder %v41, %v129
    %v132 = vsel %vm130, %v39, 0.0
    %v133 = vsel %vm131, %v40, 0.0
    %v134 = vadd.f32 %v132, %v133
    %135 = vadd.xlane.f32.xlu0 %v134
    %v136 = vpop.xlane.xlu0 %135
    %vm137 = vcmp.eq.s32.totalorder %v38, 4
    %v138 = vsel %vm137, 1, 0
    %vm139 = vcmp.eq.s32.totalorder %v138, 1
    %v140 = vsel %vm139, %v136, 0.0
    %v141 = vadd.f32 %v126, %v140
    %142 = vset.pattern.permute.xlu0 5
    %143 = vperm.xlu0 %142, %v36
    %v144 = vpop.permute.xlu0 %143
    %vm145 = vcmp.eq.s32.totalorder %v38, %v144
    %vm146 = vcmp.eq.s32.totalorder %v41, %v144
    %v147 = vsel %vm145, %v39, 0.0
    %v148 = vsel %vm146, %v40, 0.0
    %v149 = vadd.f32 %v147, %v148
    %150 = vadd.xlane.f32.xlu0 %v149
    %v151 = vpop.xlane.xlu0 %150
    %vm152 = vcmp.eq.s32.totalorder %v38, 5
    %v153 = vsel %vm152, 1, 0
    %vm154 = vcmp.eq.s32.totalorder %v153, 1
    %v155 = vsel %vm154, %v151, 0.0
    %v156 = vadd.f32 %v141, %v155
    %157 = vset.pattern.permute.xlu0 6
    %158 = vperm.xlu0 %157, %v36
    %v159 = vpop.permute.xlu0 %158
    %vm160 = vcmp.eq.s32.totalorder %v38, %v159
    %vm161 = vcmp.eq.s32.totalorder %v41, %v159
    %v162 = vsel %vm160, %v39, 0.0
    %v163 = vsel %vm161, %v40, 0.0
    %v164 = vadd.f32 %v162, %v163
    %165 = vadd.xlane.f32.xlu0 %v164
    %v166 = vpop.xlane.xlu0 %165
    %vm167 = vcmp.eq.s32.totalorder %v38, 6
    %v168 = vsel %vm167, 1, 0
    %vm169 = vcmp.eq.s32.totalorder %v168, 1
    %v170 = vsel %vm169, %v166, 0.0
    %v171 = vadd.f32 %v156, %v170
    %172 = vset.pattern.permute.xlu0 7
    %173 = vperm.xlu0 %172, %v36
    %v174 = vpop.permute.xlu0 %173
    %vm175 = vcmp.eq.s32.totalorder %v38, %v174
    %vm176 = vcmp.eq.s32.totalorder %v41, %v174
    %v177 = vsel %vm175, %v39, 0.0
    %v178 = vsel %vm176, %v40, 0.0
    %v179 = vadd.f32 %v177, %v178
    %180 = vadd.xlane.f32.xlu0 %v179
    %v181 = vpop.xlane.xlu0 %180
    %vm182 = vcmp.eq.s32.totalorder %v38, 7
    %v183 = vsel %vm182, 1, 0
    %vm184 = vcmp.eq.s32.totalorder %v183, 1
    %v185 = vsel %vm184, %v181, 0.0
    %v186 = vadd.f32 %v171, %v185
    %187 = vset.pattern.permute.xlu0 8
    %188 = vperm.xlu0 %187, %v36
    %v189 = vpop.permute.xlu0 %188
    %vm190 = vcmp.eq.s32.totalorder %v38, %v189
    %vm191 = vcmp.eq.s32.totalorder %v41, %v189
    %v192 = vsel %vm190, %v39, 0.0
    %v193 = vsel %vm191, %v40, 0.0
    %v194 = vadd.f32 %v192, %v193
    %195 = vadd.xlane.f32.xlu0 %v194
    %v196 = vpop.xlane.xlu0 %195
    %vm197 = vcmp.eq.s32.totalorder %v38, 8
    %v198 = vsel %vm197, 1, 0
    %vm199 = vcmp.eq.s32.totalorder %v198, 1
    %v200 = vsel %vm199, %v196, 0.0
    %v201 = vadd.f32 %v186, %v200
    %202 = vset.pattern.permute.xlu0 9
    %203 = vperm.xlu0 %202, %v36
    %v204 = vpop.permute.xlu0 %203
    %vm205 = vcmp.eq.s32.totalorder %v38, %v204
    %vm206 = vcmp.eq.s32.totalorder %v41, %v204
    %v207 = vsel %vm205, %v39, 0.0
    %v208 = vsel %vm206, %v40, 0.0
    %v209 = vadd.f32 %v207, %v208
    %210 = vadd.xlane.f32.xlu0 %v209
    %v211 = vpop.xlane.xlu0 %210
    %vm212 = vcmp.eq.s32.totalorder %v38, 9
    %v213 = vsel %vm212, 1, 0
    %vm214 = vcmp.eq.s32.totalorder %v213, 1
    %v215 = vsel %vm214, %v211, 0.0
    %v216 = vadd.f32 %v201, %v215
    %217 = vset.pattern.permute.xlu0 10
    %218 = vperm.xlu0 %217, %v36
    %v219 = vpop.permute.xlu0 %218
    %vm220 = vcmp.eq.s32.totalorder %v38, %v219
    %vm221 = vcmp.eq.s32.totalorder %v41, %v219
    %v222 = vsel %vm220, %v39, 0.0
    %v223 = vsel %vm221, %v40, 0.0
    %v224 = vadd.f32 %v222, %v223
    %225 = vadd.xlane.f32.xlu0 %v224
    %v226 = vpop.xlane.xlu0 %225
    %vm227 = vcmp.eq.s32.totalorder %v38, 10
    %v228 = vsel %vm227, 1, 0
    %vm229 = vcmp.eq.s32.totalorder %v228, 1
    %v230 = vsel %vm229, %v226, 0.0
    %v231 = vadd.f32 %v216, %v230
    %232 = vset.pattern.permute.xlu0 11
    %233 = vperm.xlu0 %232, %v36
    %v234 = vpop.permute.xlu0 %233
    %vm235 = vcmp.eq.s32.totalorder %v38, %v234
    %vm236 = vcmp.eq.s32.totalorder %v41, %v234
    %v237 = vsel %vm235, %v39, 0.0
    %v238 = vsel %vm236, %v40, 0.0
    %v239 = vadd.f32 %v237, %v238
    %240 = vadd.xlane.f32.xlu0 %v239
    %v241 = vpop.xlane.xlu0 %240
    %vm242 = vcmp.eq.s32.totalorder %v38, 11
    %v243 = vsel %vm242, 1, 0
    %vm244 = vcmp.eq.s32.totalorder %v243, 1
    %v245 = vsel %vm244, %v241, 0.0
    %v246 = vadd.f32 %v231, %v245
    %247 = vset.pattern.permute.xlu0 12
    %248 = vperm.xlu0 %247, %v36
    %v249 = vpop.permute.xlu0 %248
    %vm250 = vcmp.eq.s32.totalorder %v38, %v249
    %vm251 = vcmp.eq.s32.totalorder %v41, %v249
    %v252 = vsel %vm250, %v39, 0.0
    %v253 = vsel %vm251, %v40, 0.0
    %v254 = vadd.f32 %v252, %v253
    %255 = vadd.xlane.f32.xlu0 %v254
    %v256 = vpop.xlane.xlu0 %255
    %vm257 = vcmp.eq.s32.totalorder %v38, 12
    %v258 = vsel %vm257, 1, 0
    %vm259 = vcmp.eq.s32.totalorder %v258, 1
    %v260 = vsel %vm259, %v256, 0.0
    %v261 = vadd.f32 %v246, %v260
    %262 = vset.pattern.permute.xlu0 13
    %263 = vperm.xlu0 %262, %v36
    %v264 = vpop.permute.xlu0 %263
    %vm265 = vcmp.eq.s32.totalorder %v38, %v264
    %vm266 = vcmp.eq.s32.totalorder %v41, %v264
    %v267 = vsel %vm265, %v39, 0.0
    %v268 = vsel %vm266, %v40, 0.0
    %v269 = vadd.f32 %v267, %v268
    %270 = vadd.xlane.f32.xlu0 %v269
    %v271 = vpop.xlane.xlu0 %270
    %vm272 = vcmp.eq.s32.totalorder %v38, 13
    %v273 = vsel %vm272, 1, 0
    %vm274 = vcmp.eq.s32.totalorder %v273, 1
    %v275 = vsel %vm274, %v271, 0.0
    %v276 = vadd.f32 %v261, %v275
    %277 = vset.pattern.permute.xlu0 14
    %278 = vperm.xlu0 %277, %v36
    %v279 = vpop.permute.xlu0 %278
    %vm280 = vcmp.eq.s32.totalorder %v38, %v279
    %vm281 = vcmp.eq.s32.totalorder %v41, %v279
    %v282 = vsel %vm280, %v39, 0.0
    %v283 = vsel %vm281, %v40, 0.0
    %v284 = vadd.f32 %v282, %v283
    %285 = vadd.xlane.f32.xlu0 %v284
    %v286 = vpop.xlane.xlu0 %285
    %vm287 = vcmp.eq.s32.totalorder %v38, 14
    %v288 = vsel %vm287, 1, 0
    %vm289 = vcmp.eq.s32.totalorder %v288, 1
    %v290 = vsel %vm289, %v286, 0.0
    %v291 = vadd.f32 %v276, %v290
    %292 = vset.pattern.permute.xlu0 15
    %293 = vperm.xlu0 %292, %v36
    %v294 = vpop.permute.xlu0 %293
    %vm295 = vcmp.eq.s32.totalorder %v38, %v294
    %vm296 = vcmp.eq.s32.totalorder %v41, %v294
    %v297 = vsel %vm295, %v39, 0.0
    %v298 = vsel %vm296, %v40, 0.0
    %v299 = vadd.f32 %v297, %v298
    %300 = vadd.xlane.f32.xlu0 %v299
    %v301 = vpop.xlane.xlu0 %300
    %vm302 = vcmp.eq.s32.totalorder %v38, 15
    %v303 = vsel %vm302, 1, 0
    %vm304 = vcmp.eq.s32.totalorder %v303, 1
    %v305 = vsel %vm304, %v301, 0.0
    %v306 = vadd.f32 %v291, %v305
    %307 = vset.pattern.permute.xlu0 16
    %308 = vperm.xlu0 %307, %v36
    %v309 = vpop.permute.xlu0 %308
    %vm310 = vcmp.eq.s32.totalorder %v38, %v309
    %vm311 = vcmp.eq.s32.totalorder %v41, %v309
    %v312 = vsel %vm310, %v39, 0.0
    %v313 = vsel %vm311, %v40, 0.0
    %v314 = vadd.f32 %v312, %v313
    %315 = vadd.xlane.f32.xlu0 %v314
    %v316 = vpop.xlane.xlu0 %315
    %vm317 = vcmp.eq.s32.totalorder %v38, 16
    %v318 = vsel %vm317, 1, 0
    %vm319 = vcmp.eq.s32.totalorder %v318, 1
    %v320 = vsel %vm319, %v316, 0.0
    %v321 = vadd.f32 %v306, %v320
    %322 = vset.pattern.permute.xlu0 17
    %323 = vperm.xlu0 %322, %v36
    %v324 = vpop.permute.xlu0 %323
    %vm325 = vcmp.eq.s32.totalorder %v38, %v324
    %vm326 = vcmp.eq.s32.totalorder %v41, %v324
    %v327 = vsel %vm325, %v39, 0.0
    %v328 = vsel %vm326, %v40, 0.0
    %v329 = vadd.f32 %v327, %v328
    %330 = vadd.xlane.f32.xlu0 %v329
    %v331 = vpop.xlane.xlu0 %330
    %vm332 = vcmp.eq.s32.totalorder %v38, 17
    %v333 = vsel %vm332, 1, 0
    %vm334 = vcmp.eq.s32.totalorder %v333, 1
    %v335 = vsel %vm334, %v331, 0.0
    %v336 = vadd.f32 %v321, %v335
    %337 = vset.pattern.permute.xlu0 18
    %338 = vperm.xlu0 %337, %v36
    %v339 = vpop.permute.xlu0 %338
    %vm340 = vcmp.eq.s32.totalorder %v38, %v339
    %vm341 = vcmp.eq.s32.totalorder %v41, %v339
    %v342 = vsel %vm340, %v39, 0.0
    %v343 = vsel %vm341, %v40, 0.0
    %v344 = vadd.f32 %v342, %v343
    %345 = vadd.xlane.f32.xlu0 %v344
    %v346 = vpop.xlane.xlu0 %345
    %vm347 = vcmp.eq.s32.totalorder %v38, 18
    %v348 = vsel %vm347, 1, 0
    %vm349 = vcmp.eq.s32.totalorder %v348, 1
    %v350 = vsel %vm349, %v346, 0.0
    %v351 = vadd.f32 %v336, %v350
    %352 = vset.pattern.permute.xlu0 19
    %353 = vperm.xlu0 %352, %v36
    %v354 = vpop.permute.xlu0 %353
    %vm355 = vcmp.eq.s32.totalorder %v38, %v354
    %vm356 = vcmp.eq.s32.totalorder %v41, %v354
    %v357 = vsel %vm355, %v39, 0.0
    %v358 = vsel %vm356, %v40, 0.0
    %v359 = vadd.f32 %v357, %v358
    %360 = vadd.xlane.f32.xlu0 %v359
    %v361 = vpop.xlane.xlu0 %360
    %vm362 = vcmp.eq.s32.totalorder %v38, 19
    %v363 = vsel %vm362, 1, 0
    %vm364 = vcmp.eq.s32.totalorder %v363, 1
    %v365 = vsel %vm364, %v361, 0.0
    %v366 = vadd.f32 %v351, %v365
    %367 = vset.pattern.permute.xlu0 20
    %368 = vperm.xlu0 %367, %v36
    %v369 = vpop.permute.xlu0 %368
    %vm370 = vcmp.eq.s32.totalorder %v38, %v369
    %vm371 = vcmp.eq.s32.totalorder %v41, %v369
    %v372 = vsel %vm370, %v39, 0.0
    %v373 = vsel %vm371, %v40, 0.0
    %v374 = vadd.f32 %v372, %v373
    %375 = vadd.xlane.f32.xlu0 %v374
    %v376 = vpop.xlane.xlu0 %375
    %vm377 = vcmp.eq.s32.totalorder %v38, 20
    %v378 = vsel %vm377, 1, 0
    %vm379 = vcmp.eq.s32.totalorder %v378, 1
    %v380 = vsel %vm379, %v376, 0.0
    %v381 = vadd.f32 %v366, %v380
    %382 = vset.pattern.permute.xlu0 21
    %383 = vperm.xlu0 %382, %v36
    %v384 = vpop.permute.xlu0 %383
    %vm385 = vcmp.eq.s32.totalorder %v38, %v384
    %vm386 = vcmp.eq.s32.totalorder %v41, %v384
    %v387 = vsel %vm385, %v39, 0.0
    %v388 = vsel %vm386, %v40, 0.0
    %v389 = vadd.f32 %v387, %v388
    %390 = vadd.xlane.f32.xlu0 %v389
    %v391 = vpop.xlane.xlu0 %390
    %vm392 = vcmp.eq.s32.totalorder %v38, 21
    %v393 = vsel %vm392, 1, 0
    %vm394 = vcmp.eq.s32.totalorder %v393, 1
    %v395 = vsel %vm394, %v391, 0.0
    %v396 = vadd.f32 %v381, %v395
    %397 = vset.pattern.permute.xlu0 22
    %398 = vperm.xlu0 %397, %v36
    %v399 = vpop.permute.xlu0 %398
    %vm400 = vcmp.eq.s32.totalorder %v38, %v399
    %vm401 = vcmp.eq.s32.totalorder %v41, %v399
    %v402 = vsel %vm400, %v39, 0.0
    %v403 = vsel %vm401, %v40, 0.0
    %v404 = vadd.f32 %v402, %v403
    %405 = vadd.xlane.f32.xlu0 %v404
    %v406 = vpop.xlane.xlu0 %405
    %vm407 = vcmp.eq.s32.totalorder %v38, 22
    %v408 = vsel %vm407, 1, 0
    %vm409 = vcmp.eq.s32.totalorder %v408, 1
    %v410 = vsel %vm409, %v406, 0.0
    %v411 = vadd.f32 %v396, %v410
    %412 = vset.pattern.permute.xlu0 23
    %413 = vperm.xlu0 %412, %v36
    %v414 = vpop.permute.xlu0 %413
    %vm415 = vcmp.eq.s32.totalorder %v38, %v414
    %vm416 = vcmp.eq.s32.totalorder %v41, %v414
    %v417 = vsel %vm415, %v39, 0.0
    %v418 = vsel %vm416, %v40, 0.0
    %v419 = vadd.f32 %v417, %v418
    %420 = vadd.xlane.f32.xlu0 %v419
    %v421 = vpop.xlane.xlu0 %420
    %vm422 = vcmp.eq.s32.totalorder %v38, 23
    %v423 = vsel %vm422, 1, 0
    %vm424 = vcmp.eq.s32.totalorder %v423, 1
    %v425 = vsel %vm424, %v421, 0.0
    %v426 = vadd.f32 %v411, %v425
    %427 = vset.pattern.permute.xlu0 24
    %428 = vperm.xlu0 %427, %v36
    %v429 = vpop.permute.xlu0 %428
    %vm430 = vcmp.eq.s32.totalorder %v38, %v429
    %vm431 = vcmp.eq.s32.totalorder %v41, %v429
    %v432 = vsel %vm430, %v39, 0.0
    %v433 = vsel %vm431, %v40, 0.0
    %v434 = vadd.f32 %v432, %v433
    %435 = vadd.xlane.f32.xlu0 %v434
    %v436 = vpop.xlane.xlu0 %435
    %vm437 = vcmp.eq.s32.totalorder %v38, 24
    %v438 = vsel %vm437, 1, 0
    %vm439 = vcmp.eq.s32.totalorder %v438, 1
    %v440 = vsel %vm439, %v436, 0.0
    %v441 = vadd.f32 %v426, %v440
    %442 = vset.pattern.permute.xlu0 25
    %443 = vperm.xlu0 %442, %v36
    %v444 = vpop.permute.xlu0 %443
    %vm445 = vcmp.eq.s32.totalorder %v38, %v444
    %vm446 = vcmp.eq.s32.totalorder %v41, %v444
    %v447 = vsel %vm445, %v39, 0.0
    %v448 = vsel %vm446, %v40, 0.0
    %v449 = vadd.f32 %v447, %v448
    %450 = vadd.xlane.f32.xlu0 %v449
    %v451 = vpop.xlane.xlu0 %450
    %vm452 = vcmp.eq.s32.totalorder %v38, 25
    %v453 = vsel %vm452, 1, 0
    %vm454 = vcmp.eq.s32.totalorder %v453, 1
    %v455 = vsel %vm454, %v451, 0.0
    %v456 = vadd.f32 %v441, %v455
    %457 = vset.pattern.permute.xlu0 26
    %458 = vperm.xlu0 %457, %v36
    %v459 = vpop.permute.xlu0 %458
    %vm460 = vcmp.eq.s32.totalorder %v38, %v459
    %vm461 = vcmp.eq.s32.totalorder %v41, %v459
    %v462 = vsel %vm460, %v39, 0.0
    %v463 = vsel %vm461, %v40, 0.0
    %v464 = vadd.f32 %v462, %v463
    %465 = vadd.xlane.f32.xlu0 %v464
    %v466 = vpop.xlane.xlu0 %465
    %vm467 = vcmp.eq.s32.totalorder %v38, 26
    %v468 = vsel %vm467, 1, 0
    %vm469 = vcmp.eq.s32.totalorder %v468, 1
    %v470 = vsel %vm469, %v466, 0.0
    %v471 = vadd.f32 %v456, %v470
    %472 = vset.pattern.permute.xlu0 27
    %473 = vperm.xlu0 %472, %v36
    %v474 = vpop.permute.xlu0 %473
    %vm475 = vcmp.eq.s32.totalorder %v38, %v474
    %vm476 = vcmp.eq.s32.totalorder %v41, %v474
    %v477 = vsel %vm475, %v39, 0.0
    %v478 = vsel %vm476, %v40, 0.0
    %v479 = vadd.f32 %v477, %v478
    %480 = vadd.xlane.f32.xlu0 %v479
    %v481 = vpop.xlane.xlu0 %480
    %vm482 = vcmp.eq.s32.totalorder %v38, 27
    %v483 = vsel %vm482, 1, 0
    %vm484 = vcmp.eq.s32.totalorder %v483, 1
    %v485 = vsel %vm484, %v481, 0.0
    %v486 = vadd.f32 %v471, %v485
    %487 = vset.pattern.permute.xlu0 28
    %488 = vperm.xlu0 %487, %v36
    %v489 = vpop.permute.xlu0 %488
    %vm490 = vcmp.eq.s32.totalorder %v38, %v489
    %vm491 = vcmp.eq.s32.totalorder %v41, %v489
    %v492 = vsel %vm490, %v39, 0.0
    %v493 = vsel %vm491, %v40, 0.0
    %v494 = vadd.f32 %v492, %v493
    %495 = vadd.xlane.f32.xlu0 %v494
    %v496 = vpop.xlane.xlu0 %495
    %vm497 = vcmp.eq.s32.totalorder %v38, 28
    %v498 = vsel %vm497, 1, 0
    %vm499 = vcmp.eq.s32.totalorder %v498, 1
    %v500 = vsel %vm499, %v496, 0.0
    %v501 = vadd.f32 %v486, %v500
    %502 = vset.pattern.permute.xlu0 29
    %503 = vperm.xlu0 %502, %v36
    %v504 = vpop.permute.xlu0 %503
    %vm505 = vcmp.eq.s32.totalorder %v38, %v504
    %vm506 = vcmp.eq.s32.totalorder %v41, %v504
    %v507 = vsel %vm505, %v39, 0.0
    %v508 = vsel %vm506, %v40, 0.0
    %v509 = vadd.f32 %v507, %v508
    %510 = vadd.xlane.f32.xlu0 %v509
    %v511 = vpop.xlane.xlu0 %510
    %vm512 = vcmp.eq.s32.totalorder %v38, 29
    %v513 = vsel %vm512, 1, 0
    %vm514 = vcmp.eq.s32.totalorder %v513, 1
    %v515 = vsel %vm514, %v511, 0.0
    %v516 = vadd.f32 %v501, %v515
    %517 = vset.pattern.permute.xlu0 30
    %518 = vperm.xlu0 %517, %v36
    %v519 = vpop.permute.xlu0 %518
    %vm520 = vcmp.eq.s32.totalorder %v38, %v519
    %vm521 = vcmp.eq.s32.totalorder %v41, %v519
    %v522 = vsel %vm520, %v39, 0.0
    %v523 = vsel %vm521, %v40, 0.0
    %v524 = vadd.f32 %v522, %v523
    %525 = vadd.xlane.f32.xlu0 %v524
    %v526 = vpop.xlane.xlu0 %525
    %vm527 = vcmp.eq.s32.totalorder %v38, 30
    %v528 = vsel %vm527, 1, 0
    %vm529 = vcmp.eq.s32.totalorder %v528, 1
    %v530 = vsel %vm529, %v526, 0.0
    %v531 = vadd.f32 %v516, %v530
    %532 = vset.pattern.permute.xlu0 31
    %533 = vperm.xlu0 %532, %v36
    %v534 = vpop.permute.xlu0 %533
    %vm535 = vcmp.eq.s32.totalorder %v38, %v534
    %vm536 = vcmp.eq.s32.totalorder %v41, %v534
    %v537 = vsel %vm535, %v39, 0.0
    %v538 = vsel %vm536, %v40, 0.0
    %v539 = vadd.f32 %v537, %v538
    %540 = vadd.xlane.f32.xlu0 %v539
    %v541 = vpop.xlane.xlu0 %540
    %vm542 = vcmp.eq.s32.totalorder %v38, 31
    %v543 = vsel %vm542, 1, 0
    %vm544 = vcmp.eq.s32.totalorder %v543, 1
    %v545 = vsel %vm544, %v541, 0.0
    %v546 = vadd.f32 %v531, %v545
    %vm547 = vcmp.lt.s32.totalorder %v36, 0
    %vm548 = vcmp.ge.s32.totalorder %v38, 16
    %v549 = vsel %vm548, 1, 0
    %vm550 = vcmp.eq.s32.totalorder %v549, 1
    %vm551 = vmand %vm547, %vm550
    %v552 = vsel %vm551, %v44, %v546
    %vm554 = vcmask 261120
    %v555 = vsel %vm554, %v552, %v66
    %vm556 = vcmask 269312
    %v557 = vsel %vm556, %v555, 0.0
    %558 = vst [vmem:[#allocation7] sm:$0xff] %v557
    // Predicated region
    $region18: #{tpu_custom_call.1} parent=1 // pred_check
      _
    $region19: #{tpu_custom_call.1} parent=1 // pred_check_branch
      %560 = sbr.rel (0) target = $region21
    $region20: #{tpu_custom_call.1} parent=1 // pred_region
      %s562 = ssub.s32 128, 128
      %563 = vsyncadd [#allocation4], %s562
      %s565 = sshll.u32 [#allocation7], 4
      %s566 = int_to_ptr.vmem [resolvable:$true] %s565
      %568 = dma.vmem_to_hbm [thread:$0]  %s566, 128, %s2, [#allocation4]
    $region21: #{tpu_custom_call.1} parent=1 // pred_fallthru
      _
    // Predicated region
    $region22: #{tpu_custom_call.1} parent=1 // pred_check
      _
    $region23: #{tpu_custom_call.1} parent=1 // pred_check_branch
      %570 = sbr.rel (0) target = $region25
    $region24: #{tpu_custom_call.1} parent=1 // pred_region
      %571 = dma.done [#allocation4], 128
    $region25: #{tpu_custom_call.1} parent=1 // pred_fallthru
      _
    %572 = vsyncpa [#allocation3], 1
    %573 = vsyncpa [#allocation6], 1
    %574 = vsyncpa [#allocation4], 1

</llo_original>
